<compile_context>
chip_gen: v5e
topology: v5e:2x2
jax: 0.10.0
libtpu: 0.0.40
codegen_flags: <defaults>
</compile_context>

<pallas_src>
import jax
import jax.numpy as jnp
from jax.experimental import pallas as pl
from jax.experimental.pallas import tpu as pltpu


def _round_up(x, m):
    return ((x + m - 1) // m) * m


def _choose_tile_rows(rows, hbm_row_bytes, vmem_row_bytes, max_tile_rows=None):
    """Pick a batch tile so each grid step moves ~4 MiB of HBM traffic and each
    pipeline buffer stays <=4 MiB of VMEM (double-buffered input -> <=8 MiB)."""
    target_step_bytes = 4 << 20
    max_vmem_buf_bytes = 4 << 20
    tb = max(1, target_step_bytes // max(hbm_row_bytes, 1))
    tb = min(tb, max(1, max_vmem_buf_bytes // max(vmem_row_bytes, 1)))
    if max_tile_rows is not None:
        tb = min(tb, max_tile_rows)
    if tb >= rows:
        return rows                      # single block == full array (always legal)
    tb = max(8, (tb // 8) * 8)           # sublane-aligned second-to-last dim
    steps = pl.cdiv(rows, tb)
    if steps > 1 and steps % 2 == 1:
        # Even grid length -> balanced split across v7x's 2 TensorCores.
        steps += 1
        tb2 = max(8, _round_up(pl.cdiv(rows, steps), 8))
        if tb2 < rows:
            tb = tb2
    return tb


def _packed_matmul_kernel(x_ref, w_ref, o_ref):
    # x_ref: (TB, 128) f32 lane-dense packed rows, w_ref: (128, P) f32
    # block-diagonal packed weight (VMEM-resident), o_ref: (TB, P) f32.
    o_ref[...] = jnp.dot(
        x_ref[...], w_ref[...], preferred_element_type=jnp.float32
    ).astype(o_ref.dtype)


def _rowdot_mxu_kernel(x_ref, w_ref, o_ref):
    # General path: per-row dot product on the (idle) MXU instead of an XLU
    # cross-lane reduce.  x_ref: (TB, D), w_ref: (D, 1), o_ref: (TB, 1).
    o_ref[...] = jnp.dot(
        x_ref[...], w_ref[...], preferred_element_type=jnp.float32
    ).astype(o_ref.dtype)


def nn_forward(x, weight, *, max_tile_rows=None):
    """Forward of NN: out = x @ weight.T (Linear(d+1, 1, bias=False)).

    x: (B, D) float32, weight: (1, D) float32 (PyTorch Linear layout).
    Returns (B, 1) float32.  `max_tile_rows` optionally caps the batch tile
    (mainly for testing multi-step pipelined grids at small B).
    """
    B, D = x.shape
    assert weight.shape == (1, D)
    x = x.astype(jnp.float32)
    weight = weight.astype(jnp.float32)

    cost = pl.CostEstimate(
        flops=2 * B * D,
        transcendentals=0,
        bytes_accessed=4 * (B * D + D + B),
    )
    cparams = pltpu.CompilerParams(
        dimension_semantics=("parallel",),
        vmem_limit_bytes=32 * 1024 * 1024,   # portable large tiles on v5e too
    )

    if D <= 128 and 128 % D == 0 and B % (128 // D) == 0:
        # ---------------- lane-packed path (D divides 128, no pad needed) ----
        P = 128 // D                      # logical rows per 128-lane packed row
        rows = B // P
        x_packed = x.reshape(rows, P * D)  # free: row-major contiguous, no copy
        # Block-diagonal packed weight, shape (P*D, P); column j carries w at
        # rows [j*D, (j+1)*D).  Tiny; constant-folds under jit for fixed weights.
        w_packed = jnp.kron(jnp.eye(P, dtype=jnp.float32), weight.T)

        row_bytes = P * D * 4             # 512 B, dense in both HBM and VMEM
        tb = _choose_tile_rows(rows, row_bytes, row_bytes, max_tile_rows)
        grid = (pl.cdiv(rows, tb),)

        out_packed = pl.pallas_call(
            _packed_matmul_kernel,
            out_shape=jax.ShapeDtypeStruct((rows, P), jnp.float32),
            grid_spec=pltpu.PrefetchScalarGridSpec(
                num_scalar_prefetch=0,
                grid=grid,
                in_specs=[
                    pl.BlockSpec((tb, P * D), lambda i: (i, 0)),
                    pl.BlockSpec((P * D, P), lambda i: (0, 0)),  # resident weight
                ],
                out_specs=pl.BlockSpec((tb, P), lambda i: (i, 0)),
            ),
            compiler_params=cparams,
            cost_estimate=cost,
        )(x_packed, w_packed)

        # (rows, P) -> (B, 1) row-major (free reshape).
        return out_packed.reshape(B, 1)

    # ---------------- general path: tiled MXU row-dot ------------------------
    hbm_row_bytes = D * 4
    vmem_row_bytes = _round_up(D, 128) * 4   # lane-padded VMEM footprint
    tb = _choose_tile_rows(B, hbm_row_bytes, vmem_row_bytes, max_tile_rows)
    grid = (pl.cdiv(B, tb),)

    return pl.pallas_call(
        _rowdot_mxu_kernel,
        out_shape=jax.ShapeDtypeStruct((B, 1), jnp.float32),
        grid_spec=pltpu.PrefetchScalarGridSpec(
            num_scalar_prefetch=0,
            grid=grid,
            in_specs=[
                pl.BlockSpec((tb, D), lambda i: (i, 0)),
                pl.BlockSpec((D, 1), lambda i: (0, 0)),   # resident weight (D,1)
            ],
            out_specs=pl.BlockSpec((tb, 1), lambda i: (i, 0)),
        ),
        compiler_params=cparams,
        cost_estimate=cost,
    )(x, weight.T)


if __name__ == "__main__":
    key = jax.random.PRNGKey(0)

    # (d, batch, max_tile_rows):
    #  - packed path, single large block
    #  - packed path, multi-step pipelined grid (even length for megacore)
    #  - packed path, tiny batch
    #  - ragged batch (102 % 4 != 0) -> general MXU path (no wrapper pad copy)
    #  - D=48 (does not divide 128) -> general MXU path
    #  - general MXU path with a multi-step pipelined grid
    cases = [
        (31, 8192, None),
        (31, 8192, 512),
        (31, 100, None),
        (31, 102, None),
        (47, 200, None),
        (47, 4096, 512),
    ]

    for d, batch, max_tile_rows in cases:
        in_features = d + 1
        key, kx, kw = jax.random.split(key, 3)

        # Deterministic init mimicking nn.Linear's default
        # U(-1/sqrt(in_features), 1/sqrt(in_features)); no bias.
        bound = 1.0 / jnp.sqrt(jnp.float32(in_features))
        weight = jax.random.uniform(
            kw, (1, in_features), dtype=jnp.float32, minval=-bound, maxval=bound
        )
        x = jax.random.normal(kx, (batch, in_features), dtype=jnp.float32)

        out = jax.block_until_ready(
            nn_forward(x, weight, max_tile_rows=max_tile_rows)
        )

        ref = x @ weight.T
        assert out.shape == (batch, 1), (d, batch, out.shape)
        assert jnp.allclose(out, ref, atol=1e-5, rtol=1e-5), (d, batch)

    # TODO(synk): self.relu (LeakyReLU) is defined in the module but never used
    # in forward(), so it is intentionally not applied here.
    print("KERNEL_OK")
</pallas_src>

<mosaic_0001>
module attributes {stable_mosaic.version = 11 : i64} {
  func.func @_packed_matmul_kernel(%arg0: i32, %arg1: memref<2048x128xf32, #tpu.memory_space<vmem>>, %arg2: memref<128x4xf32, #tpu.memory_space<vmem>>, %arg3: memref<2048x4xf32, #tpu.memory_space<vmem>>) attributes {dimension_semantics = [#tpu.dimension_semantics<parallel>], iteration_bounds = array<i64: 1>, scalar_prefetch = 0 : i64, scratch_operands = 0 : i64, tpu.core_type = #tpu.core_type<tc>, window_params = [{transform_indices = @transform_0, window_bounds = array<i64: 2048, 128>}, {pipeline_mode = #tpu.pipeline_mode<synchronous>, transform_indices = @transform_1, window_bounds = array<i64: 128, 4>}, {transform_indices = @transform_2, window_bounds = array<i64: 2048, 4>}]} {
    %c0 = arith.constant 0 : index
    %c0_0 = arith.constant 0 : index
    %0 = vector.load %arg1[%c0, %c0_0] : memref<2048x128xf32, #tpu.memory_space<vmem>>, vector<2048x128xf32>
    %c0_1 = arith.constant 0 : index
    %c0_2 = arith.constant 0 : index
    %1 = vector.load %arg2[%c0_1, %c0_2] : memref<128x4xf32, #tpu.memory_space<vmem>>, vector<128x4xf32>
    %cst = arith.constant dense<0.000000e+00> : vector<2048x4xf32>
    %2 = tpu.matmul %0, %1, %cst {dimension_numbers = #tpu.dot_dimension_numbers<[1], [0], [0], [1], [0, 0, 1, 1], [], []>} : vector<2048x128xf32>, vector<128x4xf32>, vector<2048x4xf32> -> vector<2048x4xf32>
    %c0_3 = arith.constant 0 : index
    %c0_4 = arith.constant 0 : index
    %3 = vector.load %arg3[%c0_3, %c0_4] : memref<2048x4xf32, #tpu.memory_space<vmem>>, vector<2048x4xf32>
    tpu.vector_store %arg3[%c0_3, %c0_4], %2 {strides = array<i32>} : memref<2048x4xf32, #tpu.memory_space<vmem>>, vector<2048x4xf32>,
    return
  }
  func.func @transform_0(%arg0: i32) -> (i32, i32) {
    %c0_i32 = arith.constant 0 : i32
    %c0_i32_0 = arith.constant 0 : i32
    return %arg0, %c0_i32 : i32, i32
  }
  func.func @transform_1(%arg0: i32) -> (i32, i32) {
    %c0_i32 = arith.constant 0 : i32
    %c0_i32_0 = arith.constant 0 : i32
    %c0_i32_1 = arith.constant 0 : i32
    return %c0_i32, %c0_i32_0 : i32, i32
  }
  func.func @transform_2(%arg0: i32) -> (i32, i32) {
    %c0_i32 = arith.constant 0 : i32
    %c0_i32_0 = arith.constant 0 : i32
    return %arg0, %c0_i32 : i32, i32
  }
}

</mosaic_0001>

<llo_original>
// kernel: tpu_custom_call.1
$region0: #{tpu_custom_call.1}
  #allocation0 [shape = 'u32[]', space=smem, size = 0x4, offset = 0x4, fixed_abs, tag = 'smem constant byte address 0x4 - core index']
  #allocation1 [shape = 'u32[72,128]{1,0:T(1,128)}', space=vmem, size = 0x9000, scoped, tag = 'internal scratch']
  %s0 = inlined_call_operand.hbm [shape: f32[2048,128], index: 0, kind: input, shape index: {}]
  %s1 = inlined_call_operand.vmem [shape: f32[128,4], index: 1, kind: input, shape index: {}]
  %s2 = inlined_call_operand.vmem [shape: f32[2048,4], index: 2, kind: output, shape index: {}]
  %s3 = sld [smem:[#allocation0]]
  $region22: #{tpu_custom_call.1} parent=0
    _
  %s5 = ssub.s32 1, %s3
  %s6 = scalar_select 0, %s5, %s3
  $region1: #{tpu_custom_call.1} parent=0
    #allocation2 [shape = 'u8[1048576]{0}', space=vmem, size = 0x100000, scoped, tag = 'input window, operand 0, single buffered']
    #allocation3 [shape = 's32[1]{0}', space=sflag, size = 0x4, scoped, tag = 'scoped memory for tpu_custom_call.1']
    %7 = vsyncpa [#allocation3], 0
    // Predicated region
    $region2: #{tpu_custom_call.1} parent=1 // pred_check
      _
    $region3: #{tpu_custom_call.1} parent=1 // pred_check_branch
      %9 = sbr.rel (0) target = $region5
    $region4: #{tpu_custom_call.1} parent=1 // pred_region
      %11 = vsyncadd [#allocation3], 0
      %s12 = sshll.u32 %s0, 4
      %s13 = int_to_ptr.hbm [resolvable:$true] %s12
      %s14 = sshll.u32 [#allocation2], 4
      %s15 = int_to_ptr.vmem [resolvable:$true] %s14
      %20 = dma.hbm_to_vmem [thread:$0]  %s13, 32768, %s15, [#allocation3], 128, 128, 8
    $region5: #{tpu_custom_call.1} parent=1 // pred_fallthru
      _
    // Predicated region
    $region6: #{tpu_custom_call.1} parent=1 // pred_check
      _
    $region7: #{tpu_custom_call.1} parent=1 // pred_check_branch
      %22 = sbr.rel (0) target = $region9
    $region8: #{tpu_custom_call.1} parent=1 // pred_region
      _
    $region9: #{tpu_custom_call.1} parent=1 // pred_fallthru
      _
    // Predicated region
    $region10: #{tpu_custom_call.1} parent=1 // pred_check
      _
    $region11: #{tpu_custom_call.1} parent=1 // pred_check_branch
      %24 = sbr.rel (0) target = $region13
    $region12: #{tpu_custom_call.1} parent=1 // pred_region
      %26 = dma.done [#allocation3], 32768
    $region13: #{tpu_custom_call.1} parent=1 // pred_fallthru
      _
    %v27 = vld [vmem:[#allocation2] sm:$0xff]
    %v28 = vld [vmem:[#allocation2 + $0x8] sm:$0xff]
    %v29 = vld [vmem:[#allocation2 + $0x10] sm:$0xff]
    %v30 = vld [vmem:[#allocation2 + $0x18] sm:$0xff]
    %v31 = vld [vmem:[#allocation2 + $0x20] sm:$0xff]
    %v32 = vld [vmem:[#allocation2 + $0x28] sm:$0xff]
    %v33 = vld [vmem:[#allocation2 + $0x30] sm:$0xff]
    %v34 = vld [vmem:[#allocation2 + $0x38] sm:$0xff]
    %v35 = vld [vmem:[#allocation2 + $0x40] sm:$0xff]
    %v36 = vld [vmem:[#allocation2 + $0x48] sm:$0xff]
    %v37 = vld [vmem:[#allocation2 + $0x50] sm:$0xff]
    %v38 = vld [vmem:[#allocation2 + $0x58] sm:$0xff]
    %v39 = vld [vmem:[#allocation2 + $0x60] sm:$0xff]
    %v40 = vld [vmem:[#allocation2 + $0x68] sm:$0xff]
    %v41 = vld [vmem:[#allocation2 + $0x70] sm:$0xff]
    %v42 = vld [vmem:[#allocation2 + $0x78] sm:$0xff]
    %v43 = vld [vmem:[#allocation2 + $0x80] sm:$0xff]
    %v44 = vld [vmem:[#allocation2 + $0x88] sm:$0xff]
    %v45 = vld [vmem:[#allocation2 + $0x90] sm:$0xff]
    %v46 = vld [vmem:[#allocation2 + $0x98] sm:$0xff]
    %v47 = vld [vmem:[#allocation2 + $0xa0] sm:$0xff]
    %v48 = vld [vmem:[#allocation2 + $0xa8] sm:$0xff]
    %v49 = vld [vmem:[#allocation2 + $0xb0] sm:$0xff]
    %v50 = vld [vmem:[#allocation2 + $0xb8] sm:$0xff]
    %v51 = vld [vmem:[#allocation2 + $0xc0] sm:$0xff]
    %v52 = vld [vmem:[#allocation2 + $0xc8] sm:$0xff]
    %v53 = vld [vmem:[#allocation2 + $0xd0] sm:$0xff]
    %v54 = vld [vmem:[#allocation2 + $0xd8] sm:$0xff]
    %v55 = vld [vmem:[#allocation2 + $0xe0] sm:$0xff]
    %v56 = vld [vmem:[#allocation2 + $0xe8] sm:$0xff]
    %v57 = vld [vmem:[#allocation2 + $0xf0] sm:$0xff]
    %v58 = vld [vmem:[#allocation2 + $0xf8] sm:$0xff]
    %v59 = vld [vmem:[#allocation2 + $0x100] sm:$0xff]
    %v60 = vld [vmem:[#allocation2 + $0x108] sm:$0xff]
    %v61 = vld [vmem:[#allocation2 + $0x110] sm:$0xff]
    %v62 = vld [vmem:[#allocation2 + $0x118] sm:$0xff]
    %v63 = vld [vmem:[#allocation2 + $0x120] sm:$0xff]
    %v64 = vld [vmem:[#allocation2 + $0x128] sm:$0xff]
    %v65 = vld [vmem:[#allocation2 + $0x130] sm:$0xff]
    %v66 = vld [vmem:[#allocation2 + $0x138] sm:$0xff]
    %v67 = vld [vmem:[#allocation2 + $0x140] sm:$0xff]
    %v68 = vld [vmem:[#allocation2 + $0x148] sm:$0xff]
    %v69 = vld [vmem:[#allocation2 + $0x150] sm:$0xff]
    %v70 = vld [vmem:[#allocation2 + $0x158] sm:$0xff]
    %v71 = vld [vmem:[#allocation2 + $0x160] sm:$0xff]
    %v72 = vld [vmem:[#allocation2 + $0x168] sm:$0xff]
    %v73 = vld [vmem:[#allocation2 + $0x170] sm:$0xff]
    %v74 = vld [vmem:[#allocation2 + $0x178] sm:$0xff]
    %v75 = vld [vmem:[#allocation2 + $0x180] sm:$0xff]
    %v76 = vld [vmem:[#allocation2 + $0x188] sm:$0xff]
    %v77 = vld [vmem:[#allocation2 + $0x190] sm:$0xff]
    %v78 = vld [vmem:[#allocation2 + $0x198] sm:$0xff]
    %v79 = vld [vmem:[#allocation2 + $0x1a0] sm:$0xff]
    %v80 = vld [vmem:[#allocation2 + $0x1a8] sm:$0xff]
    %v81 = vld [vmem:[#allocation2 + $0x1b0] sm:$0xff]
    %v82 = vld [vmem:[#allocation2 + $0x1b8] sm:$0xff]
    %v83 = vld [vmem:[#allocation2 + $0x1c0] sm:$0xff]
    %v84 = vld [vmem:[#allocation2 + $0x1c8] sm:$0xff]
    %v85 = vld [vmem:[#allocation2 + $0x1d0] sm:$0xff]
    %v86 = vld [vmem:[#allocation2 + $0x1d8] sm:$0xff]
    %v87 = vld [vmem:[#allocation2 + $0x1e0] sm:$0xff]
    %v88 = vld [vmem:[#allocation2 + $0x1e8] sm:$0xff]
    %v89 = vld [vmem:[#allocation2 + $0x1f0] sm:$0xff]
    %v90 = vld [vmem:[#allocation2 + $0x1f8] sm:$0xff]
    %v91 = vld [vmem:[#allocation2 + $0x200] sm:$0xff]
    %v92 = vld [vmem:[#allocation2 + $0x208] sm:$0xff]
    %v93 = vld [vmem:[#allocation2 + $0x210] sm:$0xff]
    %v94 = vld [vmem:[#allocation2 + $0x218] sm:$0xff]
    %v95 = vld [vmem:[#allocation2 + $0x220] sm:$0xff]
    %v96 = vld [vmem:[#allocation2 + $0x228] sm:$0xff]
    %v97 = vld [vmem:[#allocation2 + $0x230] sm:$0xff]
    %v98 = vld [vmem:[#allocation2 + $0x238] sm:$0xff]
    %v99 = vld [vmem:[#allocation2 + $0x240] sm:$0xff]
    %v100 = vld [vmem:[#allocation2 + $0x248] sm:$0xff]
    %v101 = vld [vmem:[#allocation2 + $0x250] sm:$0xff]
    %v102 = vld [vmem:[#allocation2 + $0x258] sm:$0xff]
    %v103 = vld [vmem:[#allocation2 + $0x260] sm:$0xff]
    %v104 = vld [vmem:[#allocation2 + $0x268] sm:$0xff]
    %v105 = vld [vmem:[#allocation2 + $0x270] sm:$0xff]
    %v106 = vld [vmem:[#allocation2 + $0x278] sm:$0xff]
    %v107 = vld [vmem:[#allocation2 + $0x280] sm:$0xff]
    %v108 = vld [vmem:[#allocation2 + $0x288] sm:$0xff]
    %v109 = vld [vmem:[#allocation2 + $0x290] sm:$0xff]
    %v110 = vld [vmem:[#allocation2 + $0x298] sm:$0xff]
    %v111 = vld [vmem:[#allocation2 + $0x2a0] sm:$0xff]
    %v112 = vld [vmem:[#allocation2 + $0x2a8] sm:$0xff]
    %v113 = vld [vmem:[#allocation2 + $0x2b0] sm:$0xff]
    %v114 = vld [vmem:[#allocation2 + $0x2b8] sm:$0xff]
    %v115 = vld [vmem:[#allocation2 + $0x2c0] sm:$0xff]
    %v116 = vld [vmem:[#allocation2 + $0x2c8] sm:$0xff]
    %v117 = vld [vmem:[#allocation2 + $0x2d0] sm:$0xff]
    %v118 = vld [vmem:[#allocation2 + $0x2d8] sm:$0xff]
    %v119 = vld [vmem:[#allocation2 + $0x2e0] sm:$0xff]
    %v120 = vld [vmem:[#allocation2 + $0x2e8] sm:$0xff]
    %v121 = vld [vmem:[#allocation2 + $0x2f0] sm:$0xff]
    %v122 = vld [vmem:[#allocation2 + $0x2f8] sm:$0xff]
    %v123 = vld [vmem:[#allocation2 + $0x300] sm:$0xff]
    %v124 = vld [vmem:[#allocation2 + $0x308] sm:$0xff]
    %v125 = vld [vmem:[#allocation2 + $0x310] sm:$0xff]
    %v126 = vld [vmem:[#allocation2 + $0x318] sm:$0xff]
    %v127 = vld [vmem:[#allocation2 + $0x320] sm:$0xff]
    %v128 = vld [vmem:[#allocation2 + $0x328] sm:$0xff]
    %v129 = vld [vmem:[#allocation2 + $0x330] sm:$0xff]
    %v130 = vld [vmem:[#allocation2 + $0x338] sm:$0xff]
    %v131 = vld [vmem:[#allocation2 + $0x340] sm:$0xff]
    %v132 = vld [vmem:[#allocation2 + $0x348] sm:$0xff]
    %v133 = vld [vmem:[#allocation2 + $0x350] sm:$0xff]
    %v134 = vld [vmem:[#allocation2 + $0x358] sm:$0xff]
    %v135 = vld [vmem:[#allocation2 + $0x360] sm:$0xff]
    %v136 = vld [vmem:[#allocation2 + $0x368] sm:$0xff]
    %v137 = vld [vmem:[#allocation2 + $0x370] sm:$0xff]
    %v138 = vld [vmem:[#allocation2 + $0x378] sm:$0xff]
    %v139 = vld [vmem:[#allocation2 + $0x380] sm:$0xff]
    %v140 = vld [vmem:[#allocation2 + $0x388] sm:$0xff]
    %v141 = vld [vmem:[#allocation2 + $0x390] sm:$0xff]
    %v142 = vld [vmem:[#allocation2 + $0x398] sm:$0xff]
    %v143 = vld [vmem:[#allocation2 + $0x3a0] sm:$0xff]
    %v144 = vld [vmem:[#allocation2 + $0x3a8] sm:$0xff]
    %v145 = vld [vmem:[#allocation2 + $0x3b0] sm:$0xff]
    %v146 = vld [vmem:[#allocation2 + $0x3b8] sm:$0xff]
    %v147 = vld [vmem:[#allocation2 + $0x3c0] sm:$0xff]
    %v148 = vld [vmem:[#allocation2 + $0x3c8] sm:$0xff]
    %v149 = vld [vmem:[#allocation2 + $0x3d0] sm:$0xff]
    %v150 = vld [vmem:[#allocation2 + $0x3d8] sm:$0xff]
    %v151 = vld [vmem:[#allocation2 + $0x3e0] sm:$0xff]
    %v152 = vld [vmem:[#allocation2 + $0x3e8] sm:$0xff]
    %v153 = vld [vmem:[#allocation2 + $0x3f0] sm:$0xff]
    %v154 = vld [vmem:[#allocation2 + $0x3f8] sm:$0xff]
    %v155 = vld [vmem:[#allocation2 + $0x400] sm:$0xff]
    %v156 = vld [vmem:[#allocation2 + $0x408] sm:$0xff]
    %v157 = vld [vmem:[#allocation2 + $0x410] sm:$0xff]
    %v158 = vld [vmem:[#allocation2 + $0x418] sm:$0xff]
    %v159 = vld [vmem:[#allocation2 + $0x420] sm:$0xff]
    %v160 = vld [vmem:[#allocation2 + $0x428] sm:$0xff]
    %v161 = vld [vmem:[#allocation2 + $0x430] sm:$0xff]
    %v162 = vld [vmem:[#allocation2 + $0x438] sm:$0xff]
    %v163 = vld [vmem:[#allocation2 + $0x440] sm:$0xff]
    %v164 = vld [vmem:[#allocation2 + $0x448] sm:$0xff]
    %v165 = vld [vmem:[#allocation2 + $0x450] sm:$0xff]
    %v166 = vld [vmem:[#allocation2 + $0x458] sm:$0xff]
    %v167 = vld [vmem:[#allocation2 + $0x460] sm:$0xff]
    %v168 = vld [vmem:[#allocation2 + $0x468] sm:$0xff]
    %v169 = vld [vmem:[#allocation2 + $0x470] sm:$0xff]
    %v170 = vld [vmem:[#allocation2 + $0x478] sm:$0xff]
    %v171 = vld [vmem:[#allocation2 + $0x480] sm:$0xff]
    %v172 = vld [vmem:[#allocation2 + $0x488] sm:$0xff]
    %v173 = vld [vmem:[#allocation2 + $0x490] sm:$0xff]
    %v174 = vld [vmem:[#allocation2 + $0x498] sm:$0xff]
    %v175 = vld [vmem:[#allocation2 + $0x4a0] sm:$0xff]
    %v176 = vld [vmem:[#allocation2 + $0x4a8] sm:$0xff]
    %v177 = vld [vmem:[#allocation2 + $0x4b0] sm:$0xff]
    %v178 = vld [vmem:[#allocation2 + $0x4b8] sm:$0xff]
    %v179 = vld [vmem:[#allocation2 + $0x4c0] sm:$0xff]
    %v180 = vld [vmem:[#allocation2 + $0x4c8] sm:$0xff]
    %v181 = vld [vmem:[#allocation2 + $0x4d0] sm:$0xff]
    %v182 = vld [vmem:[#allocation2 + $0x4d8] sm:$0xff]
    %v183 = vld [vmem:[#allocation2 + $0x4e0] sm:$0xff]
    %v184 = vld [vmem:[#allocation2 + $0x4e8] sm:$0xff]
    %v185 = vld [vmem:[#allocation2 + $0x4f0] sm:$0xff]
    %v186 = vld [vmem:[#allocation2 + $0x4f8] sm:$0xff]
    %v187 = vld [vmem:[#allocation2 + $0x500] sm:$0xff]
    %v188 = vld [vmem:[#allocation2 + $0x508] sm:$0xff]
    %v189 = vld [vmem:[#allocation2 + $0x510] sm:$0xff]
    %v190 = vld [vmem:[#allocation2 + $0x518] sm:$0xff]
    %v191 = vld [vmem:[#allocation2 + $0x520] sm:$0xff]
    %v192 = vld [vmem:[#allocation2 + $0x528] sm:$0xff]
    %v193 = vld [vmem:[#allocation2 + $0x530] sm:$0xff]
    %v194 = vld [vmem:[#allocation2 + $0x538] sm:$0xff]
    %v195 = vld [vmem:[#allocation2 + $0x540] sm:$0xff]
    %v196 = vld [vmem:[#allocation2 + $0x548] sm:$0xff]
    %v197 = vld [vmem:[#allocation2 + $0x550] sm:$0xff]
    %v198 = vld [vmem:[#allocation2 + $0x558] sm:$0xff]
    %v199 = vld [vmem:[#allocation2 + $0x560] sm:$0xff]
    %v200 = vld [vmem:[#allocation2 + $0x568] sm:$0xff]
    %v201 = vld [vmem:[#allocation2 + $0x570] sm:$0xff]
    %v202 = vld [vmem:[#allocation2 + $0x578] sm:$0xff]
    %v203 = vld [vmem:[#allocation2 + $0x580] sm:$0xff]
    %v204 = vld [vmem:[#allocation2 + $0x588] sm:$0xff]
    %v205 = vld [vmem:[#allocation2 + $0x590] sm:$0xff]
    %v206 = vld [vmem:[#allocation2 + $0x598] sm:$0xff]
    %v207 = vld [vmem:[#allocation2 + $0x5a0] sm:$0xff]
    %v208 = vld [vmem:[#allocation2 + $0x5a8] sm:$0xff]
    %v209 = vld [vmem:[#allocation2 + $0x5b0] sm:$0xff]
    %v210 = vld [vmem:[#allocation2 + $0x5b8] sm:$0xff]
    %v211 = vld [vmem:[#allocation2 + $0x5c0] sm:$0xff]
    %v212 = vld [vmem:[#allocation2 + $0x5c8] sm:$0xff]
    %v213 = vld [vmem:[#allocation2 + $0x5d0] sm:$0xff]
    %v214 = vld [vmem:[#allocation2 + $0x5d8] sm:$0xff]
    %v215 = vld [vmem:[#allocation2 + $0x5e0] sm:$0xff]
    %v216 = vld [vmem:[#allocation2 + $0x5e8] sm:$0xff]
    %v217 = vld [vmem:[#allocation2 + $0x5f0] sm:$0xff]
    %v218 = vld [vmem:[#allocation2 + $0x5f8] sm:$0xff]
    %v219 = vld [vmem:[#allocation2 + $0x600] sm:$0xff]
    %v220 = vld [vmem:[#allocation2 + $0x608] sm:$0xff]
    %v221 = vld [vmem:[#allocation2 + $0x610] sm:$0xff]
    %v222 = vld [vmem:[#allocation2 + $0x618] sm:$0xff]
    %v223 = vld [vmem:[#allocation2 + $0x620] sm:$0xff]
    %v224 = vld [vmem:[#allocation2 + $0x628] sm:$0xff]
    %v225 = vld [vmem:[#allocation2 + $0x630] sm:$0xff]
    %v226 = vld [vmem:[#allocation2 + $0x638] sm:$0xff]
    %v227 = vld [vmem:[#allocation2 + $0x640] sm:$0xff]
    %v228 = vld [vmem:[#allocation2 + $0x648] sm:$0xff]
    %v229 = vld [vmem:[#allocation2 + $0x650] sm:$0xff]
    %v230 = vld [vmem:[#allocation2 + $0x658] sm:$0xff]
    %v231 = vld [vmem:[#allocation2 + $0x660] sm:$0xff]
    %v232 = vld [vmem:[#allocation2 + $0x668] sm:$0xff]
    %v233 = vld [vmem:[#allocation2 + $0x670] sm:$0xff]
    %v234 = vld [vmem:[#allocation2 + $0x678] sm:$0xff]
    %v235 = vld [vmem:[#allocation2 + $0x680] sm:$0xff]
    %v236 = vld [vmem:[#allocation2 + $0x688] sm:$0xff]
    %v237 = vld [vmem:[#allocation2 + $0x690] sm:$0xff]
    %v238 = vld [vmem:[#allocation2 + $0x698] sm:$0xff]
    %v239 = vld [vmem:[#allocation2 + $0x6a0] sm:$0xff]
    %v240 = vld [vmem:[#allocation2 + $0x6a8] sm:$0xff]
    %v241 = vld [vmem:[#allocation2 + $0x6b0] sm:$0xff]
    %v242 = vld [vmem:[#allocation2 + $0x6b8] sm:$0xff]
    %v243 = vld [vmem:[#allocation2 + $0x6c0] sm:$0xff]
    %v244 = vld [vmem:[#allocation2 + $0x6c8] sm:$0xff]
    %v245 = vld [vmem:[#allocation2 + $0x6d0] sm:$0xff]
    %v246 = vld [vmem:[#allocation2 + $0x6d8] sm:$0xff]
    %v247 = vld [vmem:[#allocation2 + $0x6e0] sm:$0xff]
    %v248 = vld [vmem:[#allocation2 + $0x6e8] sm:$0xff]
    %v249 = vld [vmem:[#allocation2 + $0x6f0] sm:$0xff]
    %v250 = vld [vmem:[#allocation2 + $0x6f8] sm:$0xff]
    %v251 = vld [vmem:[#allocation2 + $0x700] sm:$0xff]
    %v252 = vld [vmem:[#allocation2 + $0x708] sm:$0xff]
    %v253 = vld [vmem:[#allocation2 + $0x710] sm:$0xff]
    %v254 = vld [vmem:[#allocation2 + $0x718] sm:$0xff]
    %v255 = vld [vmem:[#allocation2 + $0x720] sm:$0xff]
    %v256 = vld [vmem:[#allocation2 + $0x728] sm:$0xff]
    %v257 = vld [vmem:[#allocation2 + $0x730] sm:$0xff]
    %v258 = vld [vmem:[#allocation2 + $0x738] sm:$0xff]
    %v259 = vld [vmem:[#allocation2 + $0x740] sm:$0xff]
    %v260 = vld [vmem:[#allocation2 + $0x748] sm:$0xff]
    %v261 = vld [vmem:[#allocation2 + $0x750] sm:$0xff]
    %v262 = vld [vmem:[#allocation2 + $0x758] sm:$0xff]
    %v263 = vld [vmem:[#allocation2 + $0x760] sm:$0xff]
    %v264 = vld [vmem:[#allocation2 + $0x768] sm:$0xff]
    %v265 = vld [vmem:[#allocation2 + $0x770] sm:$0xff]
    %v266 = vld [vmem:[#allocation2 + $0x778] sm:$0xff]
    %v267 = vld [vmem:[#allocation2 + $0x780] sm:$0xff]
    %v268 = vld [vmem:[#allocation2 + $0x788] sm:$0xff]
    %v269 = vld [vmem:[#allocation2 + $0x790] sm:$0xff]
    %v270 = vld [vmem:[#allocation2 + $0x798] sm:$0xff]
    %v271 = vld [vmem:[#allocation2 + $0x7a0] sm:$0xff]
    %v272 = vld [vmem:[#allocation2 + $0x7a8] sm:$0xff]
    %v273 = vld [vmem:[#allocation2 + $0x7b0] sm:$0xff]
    %v274 = vld [vmem:[#allocation2 + $0x7b8] sm:$0xff]
    %v275 = vld [vmem:[#allocation2 + $0x7c0] sm:$0xff]
    %v276 = vld [vmem:[#allocation2 + $0x7c8] sm:$0xff]
    %v277 = vld [vmem:[#allocation2 + $0x7d0] sm:$0xff]
    %v278 = vld [vmem:[#allocation2 + $0x7d8] sm:$0xff]
    %v279 = vld [vmem:[#allocation2 + $0x7e0] sm:$0xff]
    %v280 = vld [vmem:[#allocation2 + $0x7e8] sm:$0xff]
    %v281 = vld [vmem:[#allocation2 + $0x7f0] sm:$0xff]
    %v282 = vld [vmem:[#allocation2 + $0x7f8] sm:$0xff]
    %v283 = vld [vmem:[%s1] sm:$0xff]
    %v284 = vld [vmem:[%s1 + $0x8] sm:$0xff]
    %v285 = vld [vmem:[%s1 + $0x10] sm:$0xff]
    %v286 = vld [vmem:[%s1 + $0x18] sm:$0xff]
    %v287 = vld [vmem:[%s1 + $0x20] sm:$0xff]
    %v288 = vld [vmem:[%s1 + $0x28] sm:$0xff]
    %v289 = vld [vmem:[%s1 + $0x30] sm:$0xff]
    %v290 = vld [vmem:[%s1 + $0x38] sm:$0xff]
    %v291 = vld [vmem:[%s1 + $0x40] sm:$0xff]
    %v292 = vld [vmem:[%s1 + $0x48] sm:$0xff]
    %v293 = vld [vmem:[%s1 + $0x50] sm:$0xff]
    %v294 = vld [vmem:[%s1 + $0x58] sm:$0xff]
    %v295 = vld [vmem:[%s1 + $0x60] sm:$0xff]
    %v296 = vld [vmem:[%s1 + $0x68] sm:$0xff]
    %v297 = vld [vmem:[%s1 + $0x70] sm:$0xff]
    %v298 = vld [vmem:[%s1 + $0x78] sm:$0xff]
    %299 = vmatpush.msra.mxu0 %v298
    %300 = vmatpush.msra.mxu0 %v297
    %301 = vmatpush.msra.mxu0 %v296
    %302 = vmatpush.msra.mxu0 %v295
    %303 = vmatpush.msra.mxu0 %v294
    %304 = vmatpush.msra.mxu0 %v293
    %305 = vmatpush.msra.mxu0 %v292
    %306 = vmatpush.msra.mxu0 %v291
    %307 = vmatpush.msra.mxu0 %v290
    %308 = vmatpush.msra.mxu0 %v289
    %309 = vmatpush.msra.mxu0 %v288
    %310 = vmatpush.msra.mxu0 %v287
    %311 = vmatpush.msra.mxu0 %v286
    %312 = vmatpush.msra.mxu0 %v285
    %313 = vmatpush.msra.mxu0 %v284
    %314 = vmatpush.msra.mxu0 %v283
    %315 = vmatmul.f32.gmra.mxu0 %v27
    %v316 = vpop.f32.mrf.mxu0
    %v317 = vadd.f32 0.0, %v316
    %318 = vmatmul.f32.gmra.mxu0 %v28
    %v319 = vpop.f32.mrf.mxu0
    %v320 = vadd.f32 0.0, %v319
    %321 = vmatmul.f32.gmra.mxu0 %v29
    %v322 = vpop.f32.mrf.mxu0
    %v323 = vadd.f32 0.0, %v322
    %324 = vmatmul.f32.gmra.mxu0 %v30
    %v325 = vpop.f32.mrf.mxu0
    %v326 = vadd.f32 0.0, %v325
    %327 = vmatmul.f32.gmra.mxu0 %v31
    %v328 = vpop.f32.mrf.mxu0
    %v329 = vadd.f32 0.0, %v328
    %330 = vmatmul.f32.gmra.mxu0 %v32
    %v331 = vpop.f32.mrf.mxu0
    %v332 = vadd.f32 0.0, %v331
    %333 = vmatmul.f32.gmra.mxu0 %v33
    %v334 = vpop.f32.mrf.mxu0
    %v335 = vadd.f32 0.0, %v334
    %336 = vmatmul.f32.gmra.mxu0 %v34
    %v337 = vpop.f32.mrf.mxu0
    %v338 = vadd.f32 0.0, %v337
    %339 = vmatmul.f32.gmra.mxu0 %v35
    %v340 = vpop.f32.mrf.mxu0
    %v341 = vadd.f32 0.0, %v340
    %342 = vmatmul.f32.gmra.mxu0 %v36
    %v343 = vpop.f32.mrf.mxu0
    %v344 = vadd.f32 0.0, %v343
    %345 = vmatmul.f32.gmra.mxu0 %v37
    %v346 = vpop.f32.mrf.mxu0
    %v347 = vadd.f32 0.0, %v346
    %348 = vmatmul.f32.gmra.mxu0 %v38
    %v349 = vpop.f32.mrf.mxu0
    %v350 = vadd.f32 0.0, %v349
    %351 = vmatmul.f32.gmra.mxu0 %v39
    %v352 = vpop.f32.mrf.mxu0
    %v353 = vadd.f32 0.0, %v352
    %354 = vmatmul.f32.gmra.mxu0 %v40
    %v355 = vpop.f32.mrf.mxu0
    %v356 = vadd.f32 0.0, %v355
    %357 = vmatmul.f32.gmra.mxu0 %v41
    %v358 = vpop.f32.mrf.mxu0
    %v359 = vadd.f32 0.0, %v358
    %360 = vmatmul.f32.gmra.mxu0 %v42
    %v361 = vpop.f32.mrf.mxu0
    %v362 = vadd.f32 0.0, %v361
    %363 = vmatmul.f32.gmra.mxu0 %v43
    %v364 = vpop.f32.mrf.mxu0
    %v365 = vadd.f32 0.0, %v364
    %366 = vmatmul.f32.gmra.mxu0 %v44
    %v367 = vpop.f32.mrf.mxu0
    %v368 = vadd.f32 0.0, %v367
    %369 = vmatmul.f32.gmra.mxu0 %v45
    %v370 = vpop.f32.mrf.mxu0
    %v371 = vadd.f32 0.0, %v370
    %372 = vmatmul.f32.gmra.mxu0 %v46
    %v373 = vpop.f32.mrf.mxu0
    %v374 = vadd.f32 0.0, %v373
    %375 = vmatmul.f32.gmra.mxu0 %v47
    %v376 = vpop.f32.mrf.mxu0
    %v377 = vadd.f32 0.0, %v376
    %378 = vmatmul.f32.gmra.mxu0 %v48
    %v379 = vpop.f32.mrf.mxu0
    %v380 = vadd.f32 0.0, %v379
    %381 = vmatmul.f32.gmra.mxu0 %v49
    %v382 = vpop.f32.mrf.mxu0
    %v383 = vadd.f32 0.0, %v382
    %384 = vmatmul.f32.gmra.mxu0 %v50
    %v385 = vpop.f32.mrf.mxu0
    %v386 = vadd.f32 0.0, %v385
    %387 = vmatmul.f32.gmra.mxu0 %v51
    %v388 = vpop.f32.mrf.mxu0
    %v389 = vadd.f32 0.0, %v388
    %390 = vmatmul.f32.gmra.mxu0 %v52
    %v391 = vpop.f32.mrf.mxu0
    %v392 = vadd.f32 0.0, %v391
    %393 = vmatmul.f32.gmra.mxu0 %v53
    %v394 = vpop.f32.mrf.mxu0
    %v395 = vadd.f32 0.0, %v394
    %396 = vmatmul.f32.gmra.mxu0 %v54
    %v397 = vpop.f32.mrf.mxu0
    %v398 = vadd.f32 0.0, %v397
    %399 = vmatmul.f32.gmra.mxu0 %v55
    %v400 = vpop.f32.mrf.mxu0
    %v401 = vadd.f32 0.0, %v400
    %402 = vmatmul.f32.gmra.mxu0 %v56
    %v403 = vpop.f32.mrf.mxu0
    %v404 = vadd.f32 0.0, %v403
    %405 = vmatmul.f32.gmra.mxu0 %v57
    %v406 = vpop.f32.mrf.mxu0
    %v407 = vadd.f32 0.0, %v406
    %408 = vmatmul.f32.gmra.mxu0 %v58
    %v409 = vpop.f32.mrf.mxu0
    %v410 = vadd.f32 0.0, %v409
    %411 = vmatmul.f32.gmra.mxu0 %v59
    %v412 = vpop.f32.mrf.mxu0
    %v413 = vadd.f32 0.0, %v412
    %414 = vmatmul.f32.gmra.mxu0 %v60
    %v415 = vpop.f32.mrf.mxu0
    %v416 = vadd.f32 0.0, %v415
    %417 = vmatmul.f32.gmra.mxu0 %v61
    %v418 = vpop.f32.mrf.mxu0
    %v419 = vadd.f32 0.0, %v418
    %420 = vmatmul.f32.gmra.mxu0 %v62
    %v421 = vpop.f32.mrf.mxu0
    %v422 = vadd.f32 0.0, %v421
    %423 = vmatmul.f32.gmra.mxu0 %v63
    %v424 = vpop.f32.mrf.mxu0
    %v425 = vadd.f32 0.0, %v424
    %426 = vmatmul.f32.gmra.mxu0 %v64
    %v427 = vpop.f32.mrf.mxu0
    %v428 = vadd.f32 0.0, %v427
    %429 = vmatmul.f32.gmra.mxu0 %v65
    %v430 = vpop.f32.mrf.mxu0
    %v431 = vadd.f32 0.0, %v430
    %432 = vmatmul.f32.gmra.mxu0 %v66
    %v433 = vpop.f32.mrf.mxu0
    %v434 = vadd.f32 0.0, %v433
    %435 = vmatmul.f32.gmra.mxu0 %v67
    %v436 = vpop.f32.mrf.mxu0
    %v437 = vadd.f32 0.0, %v436
    %438 = vmatmul.f32.gmra.mxu0 %v68
    %v439 = vpop.f32.mrf.mxu0
    %v440 = vadd.f32 0.0, %v439
    %441 = vmatmul.f32.gmra.mxu0 %v69
    %v442 = vpop.f32.mrf.mxu0
    %v443 = vadd.f32 0.0, %v442
    %444 = vmatmul.f32.gmra.mxu0 %v70
    %v445 = vpop.f32.mrf.mxu0
    %v446 = vadd.f32 0.0, %v445
    %447 = vmatmul.f32.gmra.mxu0 %v71
    %v448 = vpop.f32.mrf.mxu0
    %v449 = vadd.f32 0.0, %v448
    %450 = vmatmul.f32.gmra.mxu0 %v72
    %v451 = vpop.f32.mrf.mxu0
    %v452 = vadd.f32 0.0, %v451
    %453 = vmatmul.f32.gmra.mxu0 %v73
    %v454 = vpop.f32.mrf.mxu0
    %v455 = vadd.f32 0.0, %v454
    %456 = vmatmul.f32.gmra.mxu0 %v74
    %v457 = vpop.f32.mrf.mxu0
    %v458 = vadd.f32 0.0, %v457
    %459 = vmatmul.f32.gmra.mxu0 %v75
    %v460 = vpop.f32.mrf.mxu0
    %v461 = vadd.f32 0.0, %v460
    %462 = vmatmul.f32.gmra.mxu0 %v76
    %v463 = vpop.f32.mrf.mxu0
    %v464 = vadd.f32 0.0, %v463
    %465 = vmatmul.f32.gmra.mxu0 %v77
    %v466 = vpop.f32.mrf.mxu0
    %v467 = vadd.f32 0.0, %v466
    %468 = vmatmul.f32.gmra.mxu0 %v78
    %v469 = vpop.f32.mrf.mxu0
    %v470 = vadd.f32 0.0, %v469
    %471 = vmatmul.f32.gmra.mxu0 %v79
    %v472 = vpop.f32.mrf.mxu0
    %v473 = vadd.f32 0.0, %v472
    %474 = vmatmul.f32.gmra.mxu0 %v80
    %v475 = vpop.f32.mrf.mxu0
    %v476 = vadd.f32 0.0, %v475
    %477 = vmatmul.f32.gmra.mxu0 %v81
    %v478 = vpop.f32.mrf.mxu0
    %v479 = vadd.f32 0.0, %v478
    %480 = vmatmul.f32.gmra.mxu0 %v82
    %v481 = vpop.f32.mrf.mxu0
    %v482 = vadd.f32 0.0, %v481
    %483 = vmatmul.f32.gmra.mxu0 %v83
    %v484 = vpop.f32.mrf.mxu0
    %v485 = vadd.f32 0.0, %v484
    %486 = vmatmul.f32.gmra.mxu0 %v84
    %v487 = vpop.f32.mrf.mxu0
    %v488 = vadd.f32 0.0, %v487
    %489 = vmatmul.f32.gmra.mxu0 %v85
    %v490 = vpop.f32.mrf.mxu0
    %v491 = vadd.f32 0.0, %v490
    %492 = vmatmul.f32.gmra.mxu0 %v86
    %v493 = vpop.f32.mrf.mxu0
    %v494 = vadd.f32 0.0, %v493
    %495 = vmatmul.f32.gmra.mxu0 %v87
    %v496 = vpop.f32.mrf.mxu0
    %v497 = vadd.f32 0.0, %v496
    %498 = vmatmul.f32.gmra.mxu0 %v88
    %v499 = vpop.f32.mrf.mxu0
    %v500 = vadd.f32 0.0, %v499
    %501 = vmatmul.f32.gmra.mxu0 %v89
    %v502 = vpop.f32.mrf.mxu0
    %v503 = vadd.f32 0.0, %v502
    %504 = vmatmul.f32.gmra.mxu0 %v90
    %v505 = vpop.f32.mrf.mxu0
    %v506 = vadd.f32 0.0, %v505
    %507 = vmatmul.f32.gmra.mxu0 %v91
    %v508 = vpop.f32.mrf.mxu0
    %v509 = vadd.f32 0.0, %v508
    %510 = vmatmul.f32.gmra.mxu0 %v92
    %v511 = vpop.f32.mrf.mxu0
    %v512 = vadd.f32 0.0, %v511
    %513 = vmatmul.f32.gmra.mxu0 %v93
    %v514 = vpop.f32.mrf.mxu0
    %v515 = vadd.f32 0.0, %v514
    %516 = vmatmul.f32.gmra.mxu0 %v94
    %v517 = vpop.f32.mrf.mxu0
    %v518 = vadd.f32 0.0, %v517
    %519 = vmatmul.f32.gmra.mxu0 %v95
    %v520 = vpop.f32.mrf.mxu0
    %v521 = vadd.f32 0.0, %v520
    %522 = vmatmul.f32.gmra.mxu0 %v96
    %v523 = vpop.f32.mrf.mxu0
    %v524 = vadd.f32 0.0, %v523
    %525 = vmatmul.f32.gmra.mxu0 %v97
    %v526 = vpop.f32.mrf.mxu0
    %v527 = vadd.f32 0.0, %v526
    %528 = vmatmul.f32.gmra.mxu0 %v98
    %v529 = vpop.f32.mrf.mxu0
    %v530 = vadd.f32 0.0, %v529
    %531 = vmatmul.f32.gmra.mxu0 %v99
    %v532 = vpop.f32.mrf.mxu0
    %v533 = vadd.f32 0.0, %v532
    %534 = vmatmul.f32.gmra.mxu0 %v100
    %v535 = vpop.f32.mrf.mxu0
    %v536 = vadd.f32 0.0, %v535
    %537 = vmatmul.f32.gmra.mxu0 %v101
    %v538 = vpop.f32.mrf.mxu0
    %v539 = vadd.f32 0.0, %v538
    %540 = vmatmul.f32.gmra.mxu0 %v102
    %v541 = vpop.f32.mrf.mxu0
    %v542 = vadd.f32 0.0, %v541
    %543 = vmatmul.f32.gmra.mxu0 %v103
    %v544 = vpop.f32.mrf.mxu0
    %v545 = vadd.f32 0.0, %v544
    %546 = vmatmul.f32.gmra.mxu0 %v104
    %v547 = vpop.f32.mrf.mxu0
    %v548 = vadd.f32 0.0, %v547
    %549 = vmatmul.f32.gmra.mxu0 %v105
    %v550 = vpop.f32.mrf.mxu0
    %v551 = vadd.f32 0.0, %v550
    %552 = vmatmul.f32.gmra.mxu0 %v106
    %v553 = vpop.f32.mrf.mxu0
    %v554 = vadd.f32 0.0, %v553
    %555 = vmatmul.f32.gmra.mxu0 %v107
    %v556 = vpop.f32.mrf.mxu0
    %v557 = vadd.f32 0.0, %v556
    %558 = vmatmul.f32.gmra.mxu0 %v108
    %v559 = vpop.f32.mrf.mxu0
    %v560 = vadd.f32 0.0, %v559
    %561 = vmatmul.f32.gmra.mxu0 %v109
    %v562 = vpop.f32.mrf.mxu0
    %v563 = vadd.f32 0.0, %v562
    %564 = vmatmul.f32.gmra.mxu0 %v110
    %v565 = vpop.f32.mrf.mxu0
    %v566 = vadd.f32 0.0, %v565
    %567 = vmatmul.f32.gmra.mxu0 %v111
    %v568 = vpop.f32.mrf.mxu0
    %v569 = vadd.f32 0.0, %v568
    %570 = vmatmul.f32.gmra.mxu0 %v112
    %v571 = vpop.f32.mrf.mxu0
    %v572 = vadd.f32 0.0, %v571
    %573 = vmatmul.f32.gmra.mxu0 %v113
    %v574 = vpop.f32.mrf.mxu0
    %v575 = vadd.f32 0.0, %v574
    %576 = vmatmul.f32.gmra.mxu0 %v114
    %v577 = vpop.f32.mrf.mxu0
    %v578 = vadd.f32 0.0, %v577
    %579 = vmatmul.f32.gmra.mxu0 %v115
    %v580 = vpop.f32.mrf.mxu0
    %v581 = vadd.f32 0.0, %v580
    %582 = vmatmul.f32.gmra.mxu0 %v116
    %v583 = vpop.f32.mrf.mxu0
    %v584 = vadd.f32 0.0, %v583
    %585 = vmatmul.f32.gmra.mxu0 %v117
    %v586 = vpop.f32.mrf.mxu0
    %v587 = vadd.f32 0.0, %v586
    %588 = vmatmul.f32.gmra.mxu0 %v118
    %v589 = vpop.f32.mrf.mxu0
    %v590 = vadd.f32 0.0, %v589
    %591 = vmatmul.f32.gmra.mxu0 %v119
    %v592 = vpop.f32.mrf.mxu0
    %v593 = vadd.f32 0.0, %v592
    %594 = vmatmul.f32.gmra.mxu0 %v120
    %v595 = vpop.f32.mrf.mxu0
    %v596 = vadd.f32 0.0, %v595
    %597 = vmatmul.f32.gmra.mxu0 %v121
    %v598 = vpop.f32.mrf.mxu0
    %v599 = vadd.f32 0.0, %v598
    %600 = vmatmul.f32.gmra.mxu0 %v122
    %v601 = vpop.f32.mrf.mxu0
    %v602 = vadd.f32 0.0, %v601
    %603 = vmatmul.f32.gmra.mxu0 %v123
    %v604 = vpop.f32.mrf.mxu0
    %v605 = vadd.f32 0.0, %v604
    %606 = vmatmul.f32.gmra.mxu0 %v124
    %v607 = vpop.f32.mrf.mxu0
    %v608 = vadd.f32 0.0, %v607
    %609 = vmatmul.f32.gmra.mxu0 %v125
    %v610 = vpop.f32.mrf.mxu0
    %v611 = vadd.f32 0.0, %v610
    %612 = vmatmul.f32.gmra.mxu0 %v126
    %v613 = vpop.f32.mrf.mxu0
    %v614 = vadd.f32 0.0, %v613
    %615 = vmatmul.f32.gmra.mxu0 %v127
    %v616 = vpop.f32.mrf.mxu0
    %v617 = vadd.f32 0.0, %v616
    %618 = vmatmul.f32.gmra.mxu0 %v128
    %v619 = vpop.f32.mrf.mxu0
    %v620 = vadd.f32 0.0, %v619
    %621 = vmatmul.f32.gmra.mxu0 %v129
    %v622 = vpop.f32.mrf.mxu0
    %v623 = vadd.f32 0.0, %v622
    %624 = vmatmul.f32.gmra.mxu0 %v130
    %v625 = vpop.f32.mrf.mxu0
    %v626 = vadd.f32 0.0, %v625
    %627 = vmatmul.f32.gmra.mxu0 %v131
    %v628 = vpop.f32.mrf.mxu0
    %v629 = vadd.f32 0.0, %v628
    %630 = vmatmul.f32.gmra.mxu0 %v132
    %v631 = vpop.f32.mrf.mxu0
    %v632 = vadd.f32 0.0, %v631
    %633 = vmatmul.f32.gmra.mxu0 %v133
    %v634 = vpop.f32.mrf.mxu0
    %v635 = vadd.f32 0.0, %v634
    %636 = vmatmul.f32.gmra.mxu0 %v134
    %v637 = vpop.f32.mrf.mxu0
    %v638 = vadd.f32 0.0, %v637
    %639 = vmatmul.f32.gmra.mxu0 %v135
    %v640 = vpop.f32.mrf.mxu0
    %v641 = vadd.f32 0.0, %v640
    %642 = vmatmul.f32.gmra.mxu0 %v136
    %v643 = vpop.f32.mrf.mxu0
    %v644 = vadd.f32 0.0, %v643
    %645 = vmatmul.f32.gmra.mxu0 %v137
    %v646 = vpop.f32.mrf.mxu0
    %v647 = vadd.f32 0.0, %v646
    %648 = vmatmul.f32.gmra.mxu0 %v138
    %v649 = vpop.f32.mrf.mxu0
    %v650 = vadd.f32 0.0, %v649
    %651 = vmatmul.f32.gmra.mxu0 %v139
    %v652 = vpop.f32.mrf.mxu0
    %v653 = vadd.f32 0.0, %v652
    %654 = vmatmul.f32.gmra.mxu0 %v140
    %v655 = vpop.f32.mrf.mxu0
    %v656 = vadd.f32 0.0, %v655
    %657 = vmatmul.f32.gmra.mxu0 %v141
    %v658 = vpop.f32.mrf.mxu0
    %v659 = vadd.f32 0.0, %v658
    %660 = vmatmul.f32.gmra.mxu0 %v142
    %v661 = vpop.f32.mrf.mxu0
    %v662 = vadd.f32 0.0, %v661
    %663 = vmatmul.f32.gmra.mxu0 %v143
    %v664 = vpop.f32.mrf.mxu0
    %v665 = vadd.f32 0.0, %v664
    %666 = vmatmul.f32.gmra.mxu0 %v144
    %v667 = vpop.f32.mrf.mxu0
    %v668 = vadd.f32 0.0, %v667
    %669 = vmatmul.f32.gmra.mxu0 %v145
    %v670 = vpop.f32.mrf.mxu0
    %v671 = vadd.f32 0.0, %v670
    %672 = vmatmul.f32.gmra.mxu0 %v146
    %v673 = vpop.f32.mrf.mxu0
    %v674 = vadd.f32 0.0, %v673
    %675 = vmatmul.f32.gmra.mxu0 %v147
    %v676 = vpop.f32.mrf.mxu0
    %v677 = vadd.f32 0.0, %v676
    %678 = vmatmul.f32.gmra.mxu0 %v148
    %v679 = vpop.f32.mrf.mxu0
    %v680 = vadd.f32 0.0, %v679
    %681 = vmatmul.f32.gmra.mxu0 %v149
    %v682 = vpop.f32.mrf.mxu0
    %v683 = vadd.f32 0.0, %v682
    %684 = vmatmul.f32.gmra.mxu0 %v150
    %v685 = vpop.f32.mrf.mxu0
    %v686 = vadd.f32 0.0, %v685
    %687 = vmatmul.f32.gmra.mxu0 %v151
    %v688 = vpop.f32.mrf.mxu0
    %v689 = vadd.f32 0.0, %v688
    %690 = vmatmul.f32.gmra.mxu0 %v152
    %v691 = vpop.f32.mrf.mxu0
    %v692 = vadd.f32 0.0, %v691
    %693 = vmatmul.f32.gmra.mxu0 %v153
    %v694 = vpop.f32.mrf.mxu0
    %v695 = vadd.f32 0.0, %v694
    %696 = vmatmul.f32.gmra.mxu0 %v154
    %v697 = vpop.f32.mrf.mxu0
    %v698 = vadd.f32 0.0, %v697
    %699 = vmatmul.f32.gmra.mxu0 %v155
    %v700 = vpop.f32.mrf.mxu0
    %v701 = vadd.f32 0.0, %v700
    %702 = vmatmul.f32.gmra.mxu0 %v156
    %v703 = vpop.f32.mrf.mxu0
    %v704 = vadd.f32 0.0, %v703
    %705 = vmatmul.f32.gmra.mxu0 %v157
    %v706 = vpop.f32.mrf.mxu0
    %v707 = vadd.f32 0.0, %v706
    %708 = vmatmul.f32.gmra.mxu0 %v158
    %v709 = vpop.f32.mrf.mxu0
    %v710 = vadd.f32 0.0, %v709
    %711 = vmatmul.f32.gmra.mxu0 %v159
    %v712 = vpop.f32.mrf.mxu0
    %v713 = vadd.f32 0.0, %v712
    %714 = vmatmul.f32.gmra.mxu0 %v160
    %v715 = vpop.f32.mrf.mxu0
    %v716 = vadd.f32 0.0, %v715
    %717 = vmatmul.f32.gmra.mxu0 %v161
    %v718 = vpop.f32.mrf.mxu0
    %v719 = vadd.f32 0.0, %v718
    %720 = vmatmul.f32.gmra.mxu0 %v162
    %v721 = vpop.f32.mrf.mxu0
    %v722 = vadd.f32 0.0, %v721
    %723 = vmatmul.f32.gmra.mxu0 %v163
    %v724 = vpop.f32.mrf.mxu0
    %v725 = vadd.f32 0.0, %v724
    %726 = vmatmul.f32.gmra.mxu0 %v164
    %v727 = vpop.f32.mrf.mxu0
    %v728 = vadd.f32 0.0, %v727
    %729 = vmatmul.f32.gmra.mxu0 %v165
    %v730 = vpop.f32.mrf.mxu0
    %v731 = vadd.f32 0.0, %v730
    %732 = vmatmul.f32.gmra.mxu0 %v166
    %v733 = vpop.f32.mrf.mxu0
    %v734 = vadd.f32 0.0, %v733
    %735 = vmatmul.f32.gmra.mxu0 %v167
    %v736 = vpop.f32.mrf.mxu0
    %v737 = vadd.f32 0.0, %v736
    %738 = vmatmul.f32.gmra.mxu0 %v168
    %v739 = vpop.f32.mrf.mxu0
    %v740 = vadd.f32 0.0, %v739
    %741 = vmatmul.f32.gmra.mxu0 %v169
    %v742 = vpop.f32.mrf.mxu0
    %v743 = vadd.f32 0.0, %v742
    %744 = vmatmul.f32.gmra.mxu0 %v170
    %v745 = vpop.f32.mrf.mxu0
    %v746 = vadd.f32 0.0, %v745
    %747 = vmatmul.f32.gmra.mxu0 %v171
    %v748 = vpop.f32.mrf.mxu0
    %v749 = vadd.f32 0.0, %v748
    %750 = vmatmul.f32.gmra.mxu0 %v172
    %v751 = vpop.f32.mrf.mxu0
    %v752 = vadd.f32 0.0, %v751
    %753 = vmatmul.f32.gmra.mxu0 %v173
    %v754 = vpop.f32.mrf.mxu0
    %v755 = vadd.f32 0.0, %v754
    %756 = vmatmul.f32.gmra.mxu0 %v174
    %v757 = vpop.f32.mrf.mxu0
    %v758 = vadd.f32 0.0, %v757
    %759 = vmatmul.f32.gmra.mxu0 %v175
    %v760 = vpop.f32.mrf.mxu0
    %v761 = vadd.f32 0.0, %v760
    %762 = vmatmul.f32.gmra.mxu0 %v176
    %v763 = vpop.f32.mrf.mxu0
    %v764 = vadd.f32 0.0, %v763
    %765 = vmatmul.f32.gmra.mxu0 %v177
    %v766 = vpop.f32.mrf.mxu0
    %v767 = vadd.f32 0.0, %v766
    %768 = vmatmul.f32.gmra.mxu0 %v178
    %v769 = vpop.f32.mrf.mxu0
    %v770 = vadd.f32 0.0, %v769
    %771 = vmatmul.f32.gmra.mxu0 %v179
    %v772 = vpop.f32.mrf.mxu0
    %v773 = vadd.f32 0.0, %v772
    %774 = vmatmul.f32.gmra.mxu0 %v180
    %v775 = vpop.f32.mrf.mxu0
    %v776 = vadd.f32 0.0, %v775
    %777 = vmatmul.f32.gmra.mxu0 %v181
    %v778 = vpop.f32.mrf.mxu0
    %v779 = vadd.f32 0.0, %v778
    %780 = vmatmul.f32.gmra.mxu0 %v182
    %v781 = vpop.f32.mrf.mxu0
    %v782 = vadd.f32 0.0, %v781
    %783 = vmatmul.f32.gmra.mxu0 %v183
    %v784 = vpop.f32.mrf.mxu0
    %v785 = vadd.f32 0.0, %v784
    %786 = vmatmul.f32.gmra.mxu0 %v184
    %v787 = vpop.f32.mrf.mxu0
    %v788 = vadd.f32 0.0, %v787
    %789 = vmatmul.f32.gmra.mxu0 %v185
    %v790 = vpop.f32.mrf.mxu0
    %v791 = vadd.f32 0.0, %v790
    %792 = vmatmul.f32.gmra.mxu0 %v186
    %v793 = vpop.f32.mrf.mxu0
    %v794 = vadd.f32 0.0, %v793
    %795 = vmatmul.f32.gmra.mxu0 %v187
    %v796 = vpop.f32.mrf.mxu0
    %v797 = vadd.f32 0.0, %v796
    %798 = vmatmul.f32.gmra.mxu0 %v188
    %v799 = vpop.f32.mrf.mxu0
    %v800 = vadd.f32 0.0, %v799
    %801 = vmatmul.f32.gmra.mxu0 %v189
    %v802 = vpop.f32.mrf.mxu0
    %v803 = vadd.f32 0.0, %v802
    %804 = vmatmul.f32.gmra.mxu0 %v190
    %v805 = vpop.f32.mrf.mxu0
    %v806 = vadd.f32 0.0, %v805
    %807 = vmatmul.f32.gmra.mxu0 %v191
    %v808 = vpop.f32.mrf.mxu0
    %v809 = vadd.f32 0.0, %v808
    %810 = vmatmul.f32.gmra.mxu0 %v192
    %v811 = vpop.f32.mrf.mxu0
    %v812 = vadd.f32 0.0, %v811
    %813 = vmatmul.f32.gmra.mxu0 %v193
    %v814 = vpop.f32.mrf.mxu0
    %v815 = vadd.f32 0.0, %v814
    %816 = vmatmul.f32.gmra.mxu0 %v194
    %v817 = vpop.f32.mrf.mxu0
    %v818 = vadd.f32 0.0, %v817
    %819 = vmatmul.f32.gmra.mxu0 %v195
    %v820 = vpop.f32.mrf.mxu0
    %v821 = vadd.f32 0.0, %v820
    %822 = vmatmul.f32.gmra.mxu0 %v196
    %v823 = vpop.f32.mrf.mxu0
    %v824 = vadd.f32 0.0, %v823
    %825 = vmatmul.f32.gmra.mxu0 %v197
    %v826 = vpop.f32.mrf.mxu0
    %v827 = vadd.f32 0.0, %v826
    %828 = vmatmul.f32.gmra.mxu0 %v198
    %v829 = vpop.f32.mrf.mxu0
    %v830 = vadd.f32 0.0, %v829
    %831 = vmatmul.f32.gmra.mxu0 %v199
    %v832 = vpop.f32.mrf.mxu0
    %v833 = vadd.f32 0.0, %v832
    %834 = vmatmul.f32.gmra.mxu0 %v200
    %v835 = vpop.f32.mrf.mxu0
    %v836 = vadd.f32 0.0, %v835
    %837 = vmatmul.f32.gmra.mxu0 %v201
    %v838 = vpop.f32.mrf.mxu0
    %v839 = vadd.f32 0.0, %v838
    %840 = vmatmul.f32.gmra.mxu0 %v202
    %v841 = vpop.f32.mrf.mxu0
    %v842 = vadd.f32 0.0, %v841
    %843 = vmatmul.f32.gmra.mxu0 %v203
    %v844 = vpop.f32.mrf.mxu0
    %v845 = vadd.f32 0.0, %v844
    %846 = vmatmul.f32.gmra.mxu0 %v204
    %v847 = vpop.f32.mrf.mxu0
    %v848 = vadd.f32 0.0, %v847
    %849 = vmatmul.f32.gmra.mxu0 %v205
    %v850 = vpop.f32.mrf.mxu0
    %v851 = vadd.f32 0.0, %v850
    %852 = vmatmul.f32.gmra.mxu0 %v206
    %v853 = vpop.f32.mrf.mxu0
    %v854 = vadd.f32 0.0, %v853
    %855 = vmatmul.f32.gmra.mxu0 %v207
    %v856 = vpop.f32.mrf.mxu0
    %v857 = vadd.f32 0.0, %v856
    %858 = vmatmul.f32.gmra.mxu0 %v208
    %v859 = vpop.f32.mrf.mxu0
    %v860 = vadd.f32 0.0, %v859
    %861 = vmatmul.f32.gmra.mxu0 %v209
    %v862 = vpop.f32.mrf.mxu0
    %v863 = vadd.f32 0.0, %v862
    %864 = vmatmul.f32.gmra.mxu0 %v210
    %v865 = vpop.f32.mrf.mxu0
    %v866 = vadd.f32 0.0, %v865
    %867 = vmatmul.f32.gmra.mxu0 %v211
    %v868 = vpop.f32.mrf.mxu0
    %v869 = vadd.f32 0.0, %v868
    %870 = vmatmul.f32.gmra.mxu0 %v212
    %v871 = vpop.f32.mrf.mxu0
    %v872 = vadd.f32 0.0, %v871
    %873 = vmatmul.f32.gmra.mxu0 %v213
    %v874 = vpop.f32.mrf.mxu0
    %v875 = vadd.f32 0.0, %v874
    %876 = vmatmul.f32.gmra.mxu0 %v214
    %v877 = vpop.f32.mrf.mxu0
    %v878 = vadd.f32 0.0, %v877
    %879 = vmatmul.f32.gmra.mxu0 %v215
    %v880 = vpop.f32.mrf.mxu0
    %v881 = vadd.f32 0.0, %v880
    %882 = vmatmul.f32.gmra.mxu0 %v216
    %v883 = vpop.f32.mrf.mxu0
    %v884 = vadd.f32 0.0, %v883
    %885 = vmatmul.f32.gmra.mxu0 %v217
    %v886 = vpop.f32.mrf.mxu0
    %v887 = vadd.f32 0.0, %v886
    %888 = vmatmul.f32.gmra.mxu0 %v218
    %v889 = vpop.f32.mrf.mxu0
    %v890 = vadd.f32 0.0, %v889
    %891 = vmatmul.f32.gmra.mxu0 %v219
    %v892 = vpop.f32.mrf.mxu0
    %v893 = vadd.f32 0.0, %v892
    %894 = vmatmul.f32.gmra.mxu0 %v220
    %v895 = vpop.f32.mrf.mxu0
    %v896 = vadd.f32 0.0, %v895
    %897 = vmatmul.f32.gmra.mxu0 %v221
    %v898 = vpop.f32.mrf.mxu0
    %v899 = vadd.f32 0.0, %v898
    %900 = vmatmul.f32.gmra.mxu0 %v222
    %v901 = vpop.f32.mrf.mxu0
    %v902 = vadd.f32 0.0, %v901
    %903 = vmatmul.f32.gmra.mxu0 %v223
    %v904 = vpop.f32.mrf.mxu0
    %v905 = vadd.f32 0.0, %v904
    %906 = vmatmul.f32.gmra.mxu0 %v224
    %v907 = vpop.f32.mrf.mxu0
    %v908 = vadd.f32 0.0, %v907
    %909 = vmatmul.f32.gmra.mxu0 %v225
    %v910 = vpop.f32.mrf.mxu0
    %v911 = vadd.f32 0.0, %v910
    %912 = vmatmul.f32.gmra.mxu0 %v226
    %v913 = vpop.f32.mrf.mxu0
    %v914 = vadd.f32 0.0, %v913
    %915 = vmatmul.f32.gmra.mxu0 %v227
    %v916 = vpop.f32.mrf.mxu0
    %v917 = vadd.f32 0.0, %v916
    %918 = vmatmul.f32.gmra.mxu0 %v228
    %v919 = vpop.f32.mrf.mxu0
    %v920 = vadd.f32 0.0, %v919
    %921 = vmatmul.f32.gmra.mxu0 %v229
    %v922 = vpop.f32.mrf.mxu0
    %v923 = vadd.f32 0.0, %v922
    %924 = vmatmul.f32.gmra.mxu0 %v230
    %v925 = vpop.f32.mrf.mxu0
    %v926 = vadd.f32 0.0, %v925
    %927 = vmatmul.f32.gmra.mxu0 %v231
    %v928 = vpop.f32.mrf.mxu0
    %v929 = vadd.f32 0.0, %v928
    %930 = vmatmul.f32.gmra.mxu0 %v232
    %v931 = vpop.f32.mrf.mxu0
    %v932 = vadd.f32 0.0, %v931
    %933 = vmatmul.f32.gmra.mxu0 %v233
    %v934 = vpop.f32.mrf.mxu0
    %v935 = vadd.f32 0.0, %v934
    %936 = vmatmul.f32.gmra.mxu0 %v234
    %v937 = vpop.f32.mrf.mxu0
    %v938 = vadd.f32 0.0, %v937
    %939 = vmatmul.f32.gmra.mxu0 %v235
    %v940 = vpop.f32.mrf.mxu0
    %v941 = vadd.f32 0.0, %v940
    %942 = vmatmul.f32.gmra.mxu0 %v236
    %v943 = vpop.f32.mrf.mxu0
    %v944 = vadd.f32 0.0, %v943
    %945 = vmatmul.f32.gmra.mxu0 %v237
    %v946 = vpop.f32.mrf.mxu0
    %v947 = vadd.f32 0.0, %v946
    %948 = vmatmul.f32.gmra.mxu0 %v238
    %v949 = vpop.f32.mrf.mxu0
    %v950 = vadd.f32 0.0, %v949
    %951 = vmatmul.f32.gmra.mxu0 %v239
    %v952 = vpop.f32.mrf.mxu0
    %v953 = vadd.f32 0.0, %v952
    %954 = vmatmul.f32.gmra.mxu0 %v240
    %v955 = vpop.f32.mrf.mxu0
    %v956 = vadd.f32 0.0, %v955
    %957 = vmatmul.f32.gmra.mxu0 %v241
    %v958 = vpop.f32.mrf.mxu0
    %v959 = vadd.f32 0.0, %v958
    %960 = vmatmul.f32.gmra.mxu0 %v242
    %v961 = vpop.f32.mrf.mxu0
    %v962 = vadd.f32 0.0, %v961
    %963 = vmatmul.f32.gmra.mxu0 %v243
    %v964 = vpop.f32.mrf.mxu0
    %v965 = vadd.f32 0.0, %v964
    %966 = vmatmul.f32.gmra.mxu0 %v244
    %v967 = vpop.f32.mrf.mxu0
    %v968 = vadd.f32 0.0, %v967
    %969 = vmatmul.f32.gmra.mxu0 %v245
    %v970 = vpop.f32.mrf.mxu0
    %v971 = vadd.f32 0.0, %v970
    %972 = vmatmul.f32.gmra.mxu0 %v246
    %v973 = vpop.f32.mrf.mxu0
    %v974 = vadd.f32 0.0, %v973
    %975 = vmatmul.f32.gmra.mxu0 %v247
    %v976 = vpop.f32.mrf.mxu0
    %v977 = vadd.f32 0.0, %v976
    %978 = vmatmul.f32.gmra.mxu0 %v248
    %v979 = vpop.f32.mrf.mxu0
    %v980 = vadd.f32 0.0, %v979
    %981 = vmatmul.f32.gmra.mxu0 %v249
    %v982 = vpop.f32.mrf.mxu0
    %v983 = vadd.f32 0.0, %v982
    %984 = vmatmul.f32.gmra.mxu0 %v250
    %v985 = vpop.f32.mrf.mxu0
    %v986 = vadd.f32 0.0, %v985
    %987 = vmatmul.f32.gmra.mxu0 %v251
    %v988 = vpop.f32.mrf.mxu0
    %v989 = vadd.f32 0.0, %v988
    %990 = vmatmul.f32.gmra.mxu0 %v252
    %v991 = vpop.f32.mrf.mxu0
    %v992 = vadd.f32 0.0, %v991
    %993 = vmatmul.f32.gmra.mxu0 %v253
    %v994 = vpop.f32.mrf.mxu0
    %v995 = vadd.f32 0.0, %v994
    %996 = vmatmul.f32.gmra.mxu0 %v254
    %v997 = vpop.f32.mrf.mxu0
    %v998 = vadd.f32 0.0, %v997
    %999 = vmatmul.f32.gmra.mxu0 %v255
    %v1000 = vpop.f32.mrf.mxu0
    %v1001 = vadd.f32 0.0, %v1000
    %1002 = vmatmul.f32.gmra.mxu0 %v256
    %v1003 = vpop.f32.mrf.mxu0
    %v1004 = vadd.f32 0.0, %v1003
    %1005 = vmatmul.f32.gmra.mxu0 %v257
    %v1006 = vpop.f32.mrf.mxu0
    %v1007 = vadd.f32 0.0, %v1006
    %1008 = vmatmul.f32.gmra.mxu0 %v258
    %v1009 = vpop.f32.mrf.mxu0
    %v1010 = vadd.f32 0.0, %v1009
    %1011 = vmatmul.f32.gmra.mxu0 %v259
    %v1012 = vpop.f32.mrf.mxu0
    %v1013 = vadd.f32 0.0, %v1012
    %1014 = vmatmul.f32.gmra.mxu0 %v260
    %v1015 = vpop.f32.mrf.mxu0
    %v1016 = vadd.f32 0.0, %v1015
    %1017 = vmatmul.f32.gmra.mxu0 %v261
    %v1018 = vpop.f32.mrf.mxu0
    %v1019 = vadd.f32 0.0, %v1018
    %1020 = vmatmul.f32.gmra.mxu0 %v262
    %v1021 = vpop.f32.mrf.mxu0
    %v1022 = vadd.f32 0.0, %v1021
    %1023 = vmatmul.f32.gmra.mxu0 %v263
    %v1024 = vpop.f32.mrf.mxu0
    %v1025 = vadd.f32 0.0, %v1024
    %1026 = vmatmul.f32.gmra.mxu0 %v264
    %v1027 = vpop.f32.mrf.mxu0
    %v1028 = vadd.f32 0.0, %v1027
    %1029 = vmatmul.f32.gmra.mxu0 %v265
    %v1030 = vpop.f32.mrf.mxu0
    %v1031 = vadd.f32 0.0, %v1030
    %1032 = vmatmul.f32.gmra.mxu0 %v266
    %v1033 = vpop.f32.mrf.mxu0
    %v1034 = vadd.f32 0.0, %v1033
    %1035 = vmatmul.f32.gmra.mxu0 %v267
    %v1036 = vpop.f32.mrf.mxu0
    %v1037 = vadd.f32 0.0, %v1036
    %1038 = vmatmul.f32.gmra.mxu0 %v268
    %v1039 = vpop.f32.mrf.mxu0
    %v1040 = vadd.f32 0.0, %v1039
    %1041 = vmatmul.f32.gmra.mxu0 %v269
    %v1042 = vpop.f32.mrf.mxu0
    %v1043 = vadd.f32 0.0, %v1042
    %1044 = vmatmul.f32.gmra.mxu0 %v270
    %v1045 = vpop.f32.mrf.mxu0
    %v1046 = vadd.f32 0.0, %v1045
    %1047 = vmatmul.f32.gmra.mxu0 %v271
    %v1048 = vpop.f32.mrf.mxu0
    %v1049 = vadd.f32 0.0, %v1048
    %1050 = vmatmul.f32.gmra.mxu0 %v272
    %v1051 = vpop.f32.mrf.mxu0
    %v1052 = vadd.f32 0.0, %v1051
    %1053 = vmatmul.f32.gmra.mxu0 %v273
    %v1054 = vpop.f32.mrf.mxu0
    %v1055 = vadd.f32 0.0, %v1054
    %1056 = vmatmul.f32.gmra.mxu0 %v274
    %v1057 = vpop.f32.mrf.mxu0
    %v1058 = vadd.f32 0.0, %v1057
    %1059 = vmatmul.f32.gmra.mxu0 %v275
    %v1060 = vpop.f32.mrf.mxu0
    %v1061 = vadd.f32 0.0, %v1060
    %1062 = vmatmul.f32.gmra.mxu0 %v276
    %v1063 = vpop.f32.mrf.mxu0
    %v1064 = vadd.f32 0.0, %v1063
    %1065 = vmatmul.f32.gmra.mxu0 %v277
    %v1066 = vpop.f32.mrf.mxu0
    %v1067 = vadd.f32 0.0, %v1066
    %1068 = vmatmul.f32.gmra.mxu0 %v278
    %v1069 = vpop.f32.mrf.mxu0
    %v1070 = vadd.f32 0.0, %v1069
    %1071 = vmatmul.f32.gmra.mxu0 %v279
    %v1072 = vpop.f32.mrf.mxu0
    %v1073 = vadd.f32 0.0, %v1072
    %1074 = vmatmul.f32.gmra.mxu0 %v280
    %v1075 = vpop.f32.mrf.mxu0
    %v1076 = vadd.f32 0.0, %v1075
    %1077 = vmatmul.f32.gmra.mxu0 %v281
    %v1078 = vpop.f32.mrf.mxu0
    %v1079 = vadd.f32 0.0, %v1078
    %1080 = vmatmul.f32.gmra.mxu0 %v282
    %v1081 = vpop.f32.mrf.mxu0
    %v1082 = vadd.f32 0.0, %v1081
    %1083 = vdwg.mxu0
    %vm1084 = vcmask 31744
    %1085 = vst.msk [vmem:[%s2] sm:$0xff] %vm1084, %v317
    %1086 = vst.msk [vmem:[%s2 + $0x8] sm:$0xff] %vm1084, %v320
    %1087 = vst.msk [vmem:[%s2 + $0x10] sm:$0xff] %vm1084, %v323
    %1088 = vst.msk [vmem:[%s2 + $0x18] sm:$0xff] %vm1084, %v326
    %1089 = vst.msk [vmem:[%s2 + $0x20] sm:$0xff] %vm1084, %v329
    %1090 = vst.msk [vmem:[%s2 + $0x28] sm:$0xff] %vm1084, %v332
    %1091 = vst.msk [vmem:[%s2 + $0x30] sm:$0xff] %vm1084, %v335
    %1092 = vst.msk [vmem:[%s2 + $0x38] sm:$0xff] %vm1084, %v338
    %1093 = vst.msk [vmem:[%s2 + $0x40] sm:$0xff] %vm1084, %v341
    %1094 = vst.msk [vmem:[%s2 + $0x48] sm:$0xff] %vm1084, %v344
    %1095 = vst.msk [vmem:[%s2 + $0x50] sm:$0xff] %vm1084, %v347
    %1096 = vst.msk [vmem:[%s2 + $0x58] sm:$0xff] %vm1084, %v350
    %1097 = vst.msk [vmem:[%s2 + $0x60] sm:$0xff] %vm1084, %v353
    %1098 = vst.msk [vmem:[%s2 + $0x68] sm:$0xff] %vm1084, %v356
    %1099 = vst.msk [vmem:[%s2 + $0x70] sm:$0xff] %vm1084, %v359
    %1100 = vst.msk [vmem:[%s2 + $0x78] sm:$0xff] %vm1084, %v362
    %1101 = vst.msk [vmem:[%s2 + $0x80] sm:$0xff] %vm1084, %v365
    %1102 = vst.msk [vmem:[%s2 + $0x88] sm:$0xff] %vm1084, %v368
    %1103 = vst.msk [vmem:[%s2 + $0x90] sm:$0xff] %vm1084, %v371
    %1104 = vst.msk [vmem:[%s2 + $0x98] sm:$0xff] %vm1084, %v374
    %1105 = vst.msk [vmem:[%s2 + $0xa0] sm:$0xff] %vm1084, %v377
    %1106 = vst.msk [vmem:[%s2 + $0xa8] sm:$0xff] %vm1084, %v380
    %1107 = vst.msk [vmem:[%s2 + $0xb0] sm:$0xff] %vm1084, %v383
    %1108 = vst.msk [vmem:[%s2 + $0xb8] sm:$0xff] %vm1084, %v386
    %1109 = vst.msk [vmem:[%s2 + $0xc0] sm:$0xff] %vm1084, %v389
    %1110 = vst.msk [vmem:[%s2 + $0xc8] sm:$0xff] %vm1084, %v392
    %1111 = vst.msk [vmem:[%s2 + $0xd0] sm:$0xff] %vm1084, %v395
    %1112 = vst.msk [vmem:[%s2 + $0xd8] sm:$0xff] %vm1084, %v398
    %1113 = vst.msk [vmem:[%s2 + $0xe0] sm:$0xff] %vm1084, %v401
    %1114 = vst.msk [vmem:[%s2 + $0xe8] sm:$0xff] %vm1084, %v404
    %1115 = vst.msk [vmem:[%s2 + $0xf0] sm:$0xff] %vm1084, %v407
    %1116 = vst.msk [vmem:[%s2 + $0xf8] sm:$0xff] %vm1084, %v410
    %1117 = vst.msk [vmem:[%s2 + $0x100] sm:$0xff] %vm1084, %v413
    %1118 = vst.msk [vmem:[%s2 + $0x108] sm:$0xff] %vm1084, %v416
    %1119 = vst.msk [vmem:[%s2 + $0x110] sm:$0xff] %vm1084, %v419
    %1120 = vst.msk [vmem:[%s2 + $0x118] sm:$0xff] %vm1084, %v422
    %1121 = vst.msk [vmem:[%s2 + $0x120] sm:$0xff] %vm1084, %v425
    %1122 = vst.msk [vmem:[%s2 + $0x128] sm:$0xff] %vm1084, %v428
    %1123 = vst.msk [vmem:[%s2 + $0x130] sm:$0xff] %vm1084, %v431
    %1124 = vst.msk [vmem:[%s2 + $0x138] sm:$0xff] %vm1084, %v434
    %1125 = vst.msk [vmem:[%s2 + $0x140] sm:$0xff] %vm1084, %v437
    %1126 = vst.msk [vmem:[%s2 + $0x148] sm:$0xff] %vm1084, %v440
    %1127 = vst.msk [vmem:[%s2 + $0x150] sm:$0xff] %vm1084, %v443
    %1128 = vst.msk [vmem:[%s2 + $0x158] sm:$0xff] %vm1084, %v446
    %1129 = vst.msk [vmem:[%s2 + $0x160] sm:$0xff] %vm1084, %v449
    %1130 = vst.msk [vmem:[%s2 + $0x168] sm:$0xff] %vm1084, %v452
    %1131 = vst.msk [vmem:[%s2 + $0x170] sm:$0xff] %vm1084, %v455
    %1132 = vst.msk [vmem:[%s2 + $0x178] sm:$0xff] %vm1084, %v458
    %1133 = vst.msk [vmem:[%s2 + $0x180] sm:$0xff] %vm1084, %v461
    %1134 = vst.msk [vmem:[%s2 + $0x188] sm:$0xff] %vm1084, %v464
    %1135 = vst.msk [vmem:[%s2 + $0x190] sm:$0xff] %vm1084, %v467
    %1136 = vst.msk [vmem:[%s2 + $0x198] sm:$0xff] %vm1084, %v470
    %1137 = vst.msk [vmem:[%s2 + $0x1a0] sm:$0xff] %vm1084, %v473
    %1138 = vst.msk [vmem:[%s2 + $0x1a8] sm:$0xff] %vm1084, %v476
    %1139 = vst.msk [vmem:[%s2 + $0x1b0] sm:$0xff] %vm1084, %v479
    %1140 = vst.msk [vmem:[%s2 + $0x1b8] sm:$0xff] %vm1084, %v482
    %1141 = vst.msk [vmem:[%s2 + $0x1c0] sm:$0xff] %vm1084, %v485
    %1142 = vst.msk [vmem:[%s2 + $0x1c8] sm:$0xff] %vm1084, %v488
    %1143 = vst.msk [vmem:[%s2 + $0x1d0] sm:$0xff] %vm1084, %v491
    %1144 = vst.msk [vmem:[%s2 + $0x1d8] sm:$0xff] %vm1084, %v494
    %1145 = vst.msk [vmem:[%s2 + $0x1e0] sm:$0xff] %vm1084, %v497
    %1146 = vst.msk [vmem:[%s2 + $0x1e8] sm:$0xff] %vm1084, %v500
    %1147 = vst.msk [vmem:[%s2 + $0x1f0] sm:$0xff] %vm1084, %v503
    %1148 = vst.msk [vmem:[%s2 + $0x1f8] sm:$0xff] %vm1084, %v506
    %1149 = vst.msk [vmem:[%s2 + $0x200] sm:$0xff] %vm1084, %v509
    %1150 = vst.msk [vmem:[%s2 + $0x208] sm:$0xff] %vm1084, %v512
    %1151 = vst.msk [vmem:[%s2 + $0x210] sm:$0xff] %vm1084, %v515
    %1152 = vst.msk [vmem:[%s2 + $0x218] sm:$0xff] %vm1084, %v518
    %1153 = vst.msk [vmem:[%s2 + $0x220] sm:$0xff] %vm1084, %v521
    %1154 = vst.msk [vmem:[%s2 + $0x228] sm:$0xff] %vm1084, %v524
    %1155 = vst.msk [vmem:[%s2 + $0x230] sm:$0xff] %vm1084, %v527
    %1156 = vst.msk [vmem:[%s2 + $0x238] sm:$0xff] %vm1084, %v530
    %1157 = vst.msk [vmem:[%s2 + $0x240] sm:$0xff] %vm1084, %v533
    %1158 = vst.msk [vmem:[%s2 + $0x248] sm:$0xff] %vm1084, %v536
    %1159 = vst.msk [vmem:[%s2 + $0x250] sm:$0xff] %vm1084, %v539
    %1160 = vst.msk [vmem:[%s2 + $0x258] sm:$0xff] %vm1084, %v542
    %1161 = vst.msk [vmem:[%s2 + $0x260] sm:$0xff] %vm1084, %v545
    %1162 = vst.msk [vmem:[%s2 + $0x268] sm:$0xff] %vm1084, %v548
    %1163 = vst.msk [vmem:[%s2 + $0x270] sm:$0xff] %vm1084, %v551
    %1164 = vst.msk [vmem:[%s2 + $0x278] sm:$0xff] %vm1084, %v554
    %1165 = vst.msk [vmem:[%s2 + $0x280] sm:$0xff] %vm1084, %v557
    %1166 = vst.msk [vmem:[%s2 + $0x288] sm:$0xff] %vm1084, %v560
    %1167 = vst.msk [vmem:[%s2 + $0x290] sm:$0xff] %vm1084, %v563
    %1168 = vst.msk [vmem:[%s2 + $0x298] sm:$0xff] %vm1084, %v566
    %1169 = vst.msk [vmem:[%s2 + $0x2a0] sm:$0xff] %vm1084, %v569
    %1170 = vst.msk [vmem:[%s2 + $0x2a8] sm:$0xff] %vm1084, %v572
    %1171 = vst.msk [vmem:[%s2 + $0x2b0] sm:$0xff] %vm1084, %v575
    %1172 = vst.msk [vmem:[%s2 + $0x2b8] sm:$0xff] %vm1084, %v578
    %1173 = vst.msk [vmem:[%s2 + $0x2c0] sm:$0xff] %vm1084, %v581
    %1174 = vst.msk [vmem:[%s2 + $0x2c8] sm:$0xff] %vm1084, %v584
    %1175 = vst.msk [vmem:[%s2 + $0x2d0] sm:$0xff] %vm1084, %v587
    %1176 = vst.msk [vmem:[%s2 + $0x2d8] sm:$0xff] %vm1084, %v590
    %1177 = vst.msk [vmem:[%s2 + $0x2e0] sm:$0xff] %vm1084, %v593
    %1178 = vst.msk [vmem:[%s2 + $0x2e8] sm:$0xff] %vm1084, %v596
    %1179 = vst.msk [vmem:[%s2 + $0x2f0] sm:$0xff] %vm1084, %v599
    %1180 = vst.msk [vmem:[%s2 + $0x2f8] sm:$0xff] %vm1084, %v602
    %1181 = vst.msk [vmem:[%s2 + $0x300] sm:$0xff] %vm1084, %v605
    %1182 = vst.msk [vmem:[%s2 + $0x308] sm:$0xff] %vm1084, %v608
    %1183 = vst.msk [vmem:[%s2 + $0x310] sm:$0xff] %vm1084, %v611
    %1184 = vst.msk [vmem:[%s2 + $0x318] sm:$0xff] %vm1084, %v614
    %1185 = vst.msk [vmem:[%s2 + $0x320] sm:$0xff] %vm1084, %v617
    %1186 = vst.msk [vmem:[%s2 + $0x328] sm:$0xff] %vm1084, %v620
    %1187 = vst.msk [vmem:[%s2 + $0x330] sm:$0xff] %vm1084, %v623
    %1188 = vst.msk [vmem:[%s2 + $0x338] sm:$0xff] %vm1084, %v626
    %1189 = vst.msk [vmem:[%s2 + $0x340] sm:$0xff] %vm1084, %v629
    %1190 = vst.msk [vmem:[%s2 + $0x348] sm:$0xff] %vm1084, %v632
    %1191 = vst.msk [vmem:[%s2 + $0x350] sm:$0xff] %vm1084, %v635
    %1192 = vst.msk [vmem:[%s2 + $0x358] sm:$0xff] %vm1084, %v638
    %1193 = vst.msk [vmem:[%s2 + $0x360] sm:$0xff] %vm1084, %v641
    %1194 = vst.msk [vmem:[%s2 + $0x368] sm:$0xff] %vm1084, %v644
    %1195 = vst.msk [vmem:[%s2 + $0x370] sm:$0xff] %vm1084, %v647
    %1196 = vst.msk [vmem:[%s2 + $0x378] sm:$0xff] %vm1084, %v650
    %1197 = vst.msk [vmem:[%s2 + $0x380] sm:$0xff] %vm1084, %v653
    %1198 = vst.msk [vmem:[%s2 + $0x388] sm:$0xff] %vm1084, %v656
    %1199 = vst.msk [vmem:[%s2 + $0x390] sm:$0xff] %vm1084, %v659
    %1200 = vst.msk [vmem:[%s2 + $0x398] sm:$0xff] %vm1084, %v662
    %1201 = vst.msk [vmem:[%s2 + $0x3a0] sm:$0xff] %vm1084, %v665
    %1202 = vst.msk [vmem:[%s2 + $0x3a8] sm:$0xff] %vm1084, %v668
    %1203 = vst.msk [vmem:[%s2 + $0x3b0] sm:$0xff] %vm1084, %v671
    %1204 = vst.msk [vmem:[%s2 + $0x3b8] sm:$0xff] %vm1084, %v674
    %1205 = vst.msk [vmem:[%s2 + $0x3c0] sm:$0xff] %vm1084, %v677
    %1206 = vst.msk [vmem:[%s2 + $0x3c8] sm:$0xff] %vm1084, %v680
    %1207 = vst.msk [vmem:[%s2 + $0x3d0] sm:$0xff] %vm1084, %v683
    %1208 = vst.msk [vmem:[%s2 + $0x3d8] sm:$0xff] %vm1084, %v686
    %1209 = vst.msk [vmem:[%s2 + $0x3e0] sm:$0xff] %vm1084, %v689
    %1210 = vst.msk [vmem:[%s2 + $0x3e8] sm:$0xff] %vm1084, %v692
    %1211 = vst.msk [vmem:[%s2 + $0x3f0] sm:$0xff] %vm1084, %v695
    %1212 = vst.msk [vmem:[%s2 + $0x3f8] sm:$0xff] %vm1084, %v698
    %1213 = vst.msk [vmem:[%s2 + $0x400] sm:$0xff] %vm1084, %v701
    %1214 = vst.msk [vmem:[%s2 + $0x408] sm:$0xff] %vm1084, %v704
    %1215 = vst.msk [vmem:[%s2 + $0x410] sm:$0xff] %vm1084, %v707
    %1216 = vst.msk [vmem:[%s2 + $0x418] sm:$0xff] %vm1084, %v710
    %1217 = vst.msk [vmem:[%s2 + $0x420] sm:$0xff] %vm1084, %v713
    %1218 = vst.msk [vmem:[%s2 + $0x428] sm:$0xff] %vm1084, %v716
    %1219 = vst.msk [vmem:[%s2 + $0x430] sm:$0xff] %vm1084, %v719
    %1220 = vst.msk [vmem:[%s2 + $0x438] sm:$0xff] %vm1084, %v722
    %1221 = vst.msk [vmem:[%s2 + $0x440] sm:$0xff] %vm1084, %v725
    %1222 = vst.msk [vmem:[%s2 + $0x448] sm:$0xff] %vm1084, %v728
    %1223 = vst.msk [vmem:[%s2 + $0x450] sm:$0xff] %vm1084, %v731
    %1224 = vst.msk [vmem:[%s2 + $0x458] sm:$0xff] %vm1084, %v734
    %1225 = vst.msk [vmem:[%s2 + $0x460] sm:$0xff] %vm1084, %v737
    %1226 = vst.msk [vmem:[%s2 + $0x468] sm:$0xff] %vm1084, %v740
    %1227 = vst.msk [vmem:[%s2 + $0x470] sm:$0xff] %vm1084, %v743
    %1228 = vst.msk [vmem:[%s2 + $0x478] sm:$0xff] %vm1084, %v746
    %1229 = vst.msk [vmem:[%s2 + $0x480] sm:$0xff] %vm1084, %v749
    %1230 = vst.msk [vmem:[%s2 + $0x488] sm:$0xff] %vm1084, %v752
    %1231 = vst.msk [vmem:[%s2 + $0x490] sm:$0xff] %vm1084, %v755
    %1232 = vst.msk [vmem:[%s2 + $0x498] sm:$0xff] %vm1084, %v758
    %1233 = vst.msk [vmem:[%s2 + $0x4a0] sm:$0xff] %vm1084, %v761
    %1234 = vst.msk [vmem:[%s2 + $0x4a8] sm:$0xff] %vm1084, %v764
    %1235 = vst.msk [vmem:[%s2 + $0x4b0] sm:$0xff] %vm1084, %v767
    %1236 = vst.msk [vmem:[%s2 + $0x4b8] sm:$0xff] %vm1084, %v770
    %1237 = vst.msk [vmem:[%s2 + $0x4c0] sm:$0xff] %vm1084, %v773
    %1238 = vst.msk [vmem:[%s2 + $0x4c8] sm:$0xff] %vm1084, %v776
    %1239 = vst.msk [vmem:[%s2 + $0x4d0] sm:$0xff] %vm1084, %v779
    %1240 = vst.msk [vmem:[%s2 + $0x4d8] sm:$0xff] %vm1084, %v782
    %1241 = vst.msk [vmem:[%s2 + $0x4e0] sm:$0xff] %vm1084, %v785
    %1242 = vst.msk [vmem:[%s2 + $0x4e8] sm:$0xff] %vm1084, %v788
    %1243 = vst.msk [vmem:[%s2 + $0x4f0] sm:$0xff] %vm1084, %v791
    %1244 = vst.msk [vmem:[%s2 + $0x4f8] sm:$0xff] %vm1084, %v794
    %1245 = vst.msk [vmem:[%s2 + $0x500] sm:$0xff] %vm1084, %v797
    %1246 = vst.msk [vmem:[%s2 + $0x508] sm:$0xff] %vm1084, %v800
    %1247 = vst.msk [vmem:[%s2 + $0x510] sm:$0xff] %vm1084, %v803
    %1248 = vst.msk [vmem:[%s2 + $0x518] sm:$0xff] %vm1084, %v806
    %1249 = vst.msk [vmem:[%s2 + $0x520] sm:$0xff] %vm1084, %v809
    %1250 = vst.msk [vmem:[%s2 + $0x528] sm:$0xff] %vm1084, %v812
    %1251 = vst.msk [vmem:[%s2 + $0x530] sm:$0xff] %vm1084, %v815
    %1252 = vst.msk [vmem:[%s2 + $0x538] sm:$0xff] %vm1084, %v818
    %1253 = vst.msk [vmem:[%s2 + $0x540] sm:$0xff] %vm1084, %v821
    %1254 = vst.msk [vmem:[%s2 + $0x548] sm:$0xff] %vm1084, %v824
    %1255 = vst.msk [vmem:[%s2 + $0x550] sm:$0xff] %vm1084, %v827
    %1256 = vst.msk [vmem:[%s2 + $0x558] sm:$0xff] %vm1084, %v830
    %1257 = vst.msk [vmem:[%s2 + $0x560] sm:$0xff] %vm1084, %v833
    %1258 = vst.msk [vmem:[%s2 + $0x568] sm:$0xff] %vm1084, %v836
    %1259 = vst.msk [vmem:[%s2 + $0x570] sm:$0xff] %vm1084, %v839
    %1260 = vst.msk [vmem:[%s2 + $0x578] sm:$0xff] %vm1084, %v842
    %1261 = vst.msk [vmem:[%s2 + $0x580] sm:$0xff] %vm1084, %v845
    %1262 = vst.msk [vmem:[%s2 + $0x588] sm:$0xff] %vm1084, %v848
    %1263 = vst.msk [vmem:[%s2 + $0x590] sm:$0xff] %vm1084, %v851
    %1264 = vst.msk [vmem:[%s2 + $0x598] sm:$0xff] %vm1084, %v854
    %1265 = vst.msk [vmem:[%s2 + $0x5a0] sm:$0xff] %vm1084, %v857
    %1266 = vst.msk [vmem:[%s2 + $0x5a8] sm:$0xff] %vm1084, %v860
    %1267 = vst.msk [vmem:[%s2 + $0x5b0] sm:$0xff] %vm1084, %v863
    %1268 = vst.msk [vmem:[%s2 + $0x5b8] sm:$0xff] %vm1084, %v866
    %1269 = vst.msk [vmem:[%s2 + $0x5c0] sm:$0xff] %vm1084, %v869
    %1270 = vst.msk [vmem:[%s2 + $0x5c8] sm:$0xff] %vm1084, %v872
    %1271 = vst.msk [vmem:[%s2 + $0x5d0] sm:$0xff] %vm1084, %v875
    %1272 = vst.msk [vmem:[%s2 + $0x5d8] sm:$0xff] %vm1084, %v878
    %1273 = vst.msk [vmem:[%s2 + $0x5e0] sm:$0xff] %vm1084, %v881
    %1274 = vst.msk [vmem:[%s2 + $0x5e8] sm:$0xff] %vm1084, %v884
    %1275 = vst.msk [vmem:[%s2 + $0x5f0] sm:$0xff] %vm1084, %v887
    %1276 = vst.msk [vmem:[%s2 + $0x5f8] sm:$0xff] %vm1084, %v890
    %1277 = vst.msk [vmem:[%s2 + $0x600] sm:$0xff] %vm1084, %v893
    %1278 = vst.msk [vmem:[%s2 + $0x608] sm:$0xff] %vm1084, %v896
    %1279 = vst.msk [vmem:[%s2 + $0x610] sm:$0xff] %vm1084, %v899
    %1280 = vst.msk [vmem:[%s2 + $0x618] sm:$0xff] %vm1084, %v902
    %1281 = vst.msk [vmem:[%s2 + $0x620] sm:$0xff] %vm1084, %v905
    %1282 = vst.msk [vmem:[%s2 + $0x628] sm:$0xff] %vm1084, %v908
    %1283 = vst.msk [vmem:[%s2 + $0x630] sm:$0xff] %vm1084, %v911
    %1284 = vst.msk [vmem:[%s2 + $0x638] sm:$0xff] %vm1084, %v914
    %1285 = vst.msk [vmem:[%s2 + $0x640] sm:$0xff] %vm1084, %v917
    %1286 = vst.msk [vmem:[%s2 + $0x648] sm:$0xff] %vm1084, %v920
    %1287 = vst.msk [vmem:[%s2 + $0x650] sm:$0xff] %vm1084, %v923
    %1288 = vst.msk [vmem:[%s2 + $0x658] sm:$0xff] %vm1084, %v926
    %1289 = vst.msk [vmem:[%s2 + $0x660] sm:$0xff] %vm1084, %v929
    %1290 = vst.msk [vmem:[%s2 + $0x668] sm:$0xff] %vm1084, %v932
    %1291 = vst.msk [vmem:[%s2 + $0x670] sm:$0xff] %vm1084, %v935
    %1292 = vst.msk [vmem:[%s2 + $0x678] sm:$0xff] %vm1084, %v938
    %1293 = vst.msk [vmem:[%s2 + $0x680] sm:$0xff] %vm1084, %v941
    %1294 = vst.msk [vmem:[%s2 + $0x688] sm:$0xff] %vm1084, %v944
    %1295 = vst.msk [vmem:[%s2 + $0x690] sm:$0xff] %vm1084, %v947
    %1296 = vst.msk [vmem:[%s2 + $0x698] sm:$0xff] %vm1084, %v950
    %1297 = vst.msk [vmem:[%s2 + $0x6a0] sm:$0xff] %vm1084, %v953
    %1298 = vst.msk [vmem:[%s2 + $0x6a8] sm:$0xff] %vm1084, %v956
    %1299 = vst.msk [vmem:[%s2 + $0x6b0] sm:$0xff] %vm1084, %v959
    %1300 = vst.msk [vmem:[%s2 + $0x6b8] sm:$0xff] %vm1084, %v962
    %1301 = vst.msk [vmem:[%s2 + $0x6c0] sm:$0xff] %vm1084, %v965
    %1302 = vst.msk [vmem:[%s2 + $0x6c8] sm:$0xff] %vm1084, %v968
    %1303 = vst.msk [vmem:[%s2 + $0x6d0] sm:$0xff] %vm1084, %v971
    %1304 = vst.msk [vmem:[%s2 + $0x6d8] sm:$0xff] %vm1084, %v974
    %1305 = vst.msk [vmem:[%s2 + $0x6e0] sm:$0xff] %vm1084, %v977
    %1306 = vst.msk [vmem:[%s2 + $0x6e8] sm:$0xff] %vm1084, %v980
    %1307 = vst.msk [vmem:[%s2 + $0x6f0] sm:$0xff] %vm1084, %v983
    %1308 = vst.msk [vmem:[%s2 + $0x6f8] sm:$0xff] %vm1084, %v986
    %1309 = vst.msk [vmem:[%s2 + $0x700] sm:$0xff] %vm1084, %v989
    %1310 = vst.msk [vmem:[%s2 + $0x708] sm:$0xff] %vm1084, %v992
    %1311 = vst.msk [vmem:[%s2 + $0x710] sm:$0xff] %vm1084, %v995
    %1312 = vst.msk [vmem:[%s2 + $0x718] sm:$0xff] %vm1084, %v998
    %1313 = vst.msk [vmem:[%s2 + $0x720] sm:$0xff] %vm1084, %v1001
    %1314 = vst.msk [vmem:[%s2 + $0x728] sm:$0xff] %vm1084, %v1004
    %1315 = vst.msk [vmem:[%s2 + $0x730] sm:$0xff] %vm1084, %v1007
    %1316 = vst.msk [vmem:[%s2 + $0x738] sm:$0xff] %vm1084, %v1010
    %1317 = vst.msk [vmem:[%s2 + $0x740] sm:$0xff] %vm1084, %v1013
    %1318 = vst.msk [vmem:[%s2 + $0x748] sm:$0xff] %vm1084, %v1016
    %1319 = vst.msk [vmem:[%s2 + $0x750] sm:$0xff] %vm1084, %v1019
    %1320 = vst.msk [vmem:[%s2 + $0x758] sm:$0xff] %vm1084, %v1022
    %1321 = vst.msk [vmem:[%s2 + $0x760] sm:$0xff] %vm1084, %v1025
    %1322 = vst.msk [vmem:[%s2 + $0x768] sm:$0xff] %vm1084, %v1028
    %1323 = vst.msk [vmem:[%s2 + $0x770] sm:$0xff] %vm1084, %v1031
    %1324 = vst.msk [vmem:[%s2 + $0x778] sm:$0xff] %vm1084, %v1034
    %1325 = vst.msk [vmem:[%s2 + $0x780] sm:$0xff] %vm1084, %v1037
    %1326 = vst.msk [vmem:[%s2 + $0x788] sm:$0xff] %vm1084, %v1040
    %1327 = vst.msk [vmem:[%s2 + $0x790] sm:$0xff] %vm1084, %v1043
    %1328 = vst.msk [vmem:[%s2 + $0x798] sm:$0xff] %vm1084, %v1046
    %1329 = vst.msk [vmem:[%s2 + $0x7a0] sm:$0xff] %vm1084, %v1049
    %1330 = vst.msk [vmem:[%s2 + $0x7a8] sm:$0xff] %vm1084, %v1052
    %1331 = vst.msk [vmem:[%s2 + $0x7b0] sm:$0xff] %vm1084, %v1055
    %1332 = vst.msk [vmem:[%s2 + $0x7b8] sm:$0xff] %vm1084, %v1058
    %1333 = vst.msk [vmem:[%s2 + $0x7c0] sm:$0xff] %vm1084, %v1061
    %1334 = vst.msk [vmem:[%s2 + $0x7c8] sm:$0xff] %vm1084, %v1064
    %1335 = vst.msk [vmem:[%s2 + $0x7d0] sm:$0xff] %vm1084, %v1067
    %1336 = vst.msk [vmem:[%s2 + $0x7d8] sm:$0xff] %vm1084, %v1070
    %1337 = vst.msk [vmem:[%s2 + $0x7e0] sm:$0xff] %vm1084, %v1073
    %1338 = vst.msk [vmem:[%s2 + $0x7e8] sm:$0xff] %vm1084, %v1076
    %1339 = vst.msk [vmem:[%s2 + $0x7f0] sm:$0xff] %vm1084, %v1079
    %1340 = vst.msk [vmem:[%s2 + $0x7f8] sm:$0xff] %vm1084, %v1082
    // Predicated region
    $region14: #{tpu_custom_call.1} parent=1 // pred_check
      _
    $region15: #{tpu_custom_call.1} parent=1 // pred_check_branch
      %1342 = sbr.rel (0) target = $region17
    $region16: #{tpu_custom_call.1} parent=1 // pred_region
      _
    $region17: #{tpu_custom_call.1} parent=1 // pred_fallthru
      _
    // Predicated region
    $region18: #{tpu_custom_call.1} parent=1 // pred_check
      _
    $region19: #{tpu_custom_call.1} parent=1 // pred_check_branch
      %1344 = sbr.rel (0) target = $region21
    $region20: #{tpu_custom_call.1} parent=1 // pred_region
      _
    $region21: #{tpu_custom_call.1} parent=1 // pred_fallthru
      _
    %1345 = vsyncpa [#allocation3], 1

</llo_original>
